<compile_context>
chip_gen: v6e
topology: v6e:2x2x1
jax: 0.10.0
libtpu: 0.0.40
codegen_flags: <defaults>
</compile_context>

<pallas_src>
import jax
import jax.numpy as jnp
from jax import lax
from jax.experimental import pallas as pl
from jax.experimental.pallas import tpu as pltpu


def _bimap_kernel(x_ref, w_ref, o_ref):
    """Grid = (batch // bt,).

    x_ref : (bt, hi, ni, ni) VMEM tile of X for bt batch elements
    w_ref : (ho, hi, ni, no) full W, resident in VMEM across all grid steps
    o_ref : (bt, no, ho*no)  lane-packed output:
            o[lb, p, co*no + q] = P[b0+lb, co, p, q]
    """
    bt, hi, ni, _ = x_ref.shape
    ho, _, _, no = w_ref.shape

    rows = []
    # bt and ho are small and static -> fully unrolled; all work for this batch
    # tile stays inside one grid step.
    for lb in range(bt):
        x = x_ref[lb]  # (hi, ni, ni), static index
        cols = []
        for co in range(ho):
            w_co = w_ref[co]  # (hi, ni, no), static index

            # XW[c] = X[b, c] @ W[co, c], batched over the hi channel axis.
            xw = lax.dot_general(
                x, w_co,
                dimension_numbers=(((2,), (1,)), ((0,), (0,))),
                preferred_element_type=jnp.float32,
            )  # (hi, ni, no)

            # sum_ci W[co,ci]^T @ XW[ci]  ==  one contraction over K = hi*ni.
            p = lax.dot_general(
                w_co.reshape(hi * ni, no),   # last dim unchanged -> cheap reshape
                xw.reshape(hi * ni, no),
                dimension_numbers=(((0,), (0,)), ((), ())),
                preferred_element_type=jnp.float32,
            )  # (no, no) == P[b, co]
            cols.append(p)

        # Pack all output channels along the lane axis.
        rows.append(jnp.concatenate(cols, axis=-1))  # (no, ho*no)

    # Single wide store for the whole batch tile.
    o_ref[...] = jnp.stack(rows, axis=0).astype(o_ref.dtype)  # (bt, no, ho*no)


def _pick_batch_tile(B, hi, ni, ho, no, itemsize=4,
                     vmem_budget=12 * 1024 * 1024, max_tile=8):
    """Largest divisor of B (capped) whose double-buffered blocks + resident W
    fit in a conservative VMEM budget (safe on v5e/v6e/v7x defaults)."""
    w_bytes = 2 * ho * hi * ni * no * itemsize   # assume double-buffered W too

    def est(bt):
        x_bytes = 2 * bt * hi * ni * ni * itemsize
        o_bytes = 2 * bt * no * ho * no * itemsize
        return w_bytes + x_bytes + o_bytes

    best = 1
    for bt in range(1, min(B, max_tile) + 1):
        if B % bt == 0 and est(bt) <= vmem_budget:
            best = bt
    return best


def bimap_channels(X, W):
    """Pallas BiMap forward.

    X: (B, hi, ni, ni), W: (ho, hi, ni, no) -> P: (B, ho, no, no)
    """
    B, hi, ni, ni2 = X.shape
    ho, hi_w, ni_w, no = W.shape
    assert hi == hi_w and ni == ni_w and ni == ni2

    bt = _pick_batch_tile(B, hi, ni, ho, no)

    # NOTE on scaling: for large SPDNet sizes (ni ~ 200-400) the resident W and
    # X tile grow; _pick_batch_tile falls back to bt=1 and, if still too big,
    # chunk hi and/or raise vmem_limit_bytes via pltpu.CompilerParams.
    out_flat = pl.pallas_call(
        _bimap_kernel,
        out_shape=jax.ShapeDtypeStruct((B, no, ho * no), X.dtype),
        grid_spec=pltpu.PrefetchScalarGridSpec(
            num_scalar_prefetch=0,
            grid=(B // bt,),
            in_specs=[
                # X tile: bt whole (hi, ni, ni) stacks.
                pl.BlockSpec((bt, hi, ni, ni), lambda b: (b, 0, 0, 0)),
                # Whole W, constant block index -> fetched once, stays in VMEM.
                pl.BlockSpec((ho, hi, ni, no), lambda b: (0, 0, 0, 0)),
            ],
            out_specs=pl.BlockSpec((bt, no, ho * no), lambda b: (b, 0, 0)),
        ),
        compiler_params=pltpu.CompilerParams(
            dimension_semantics=("parallel",),
        ),
    )(X, W)

    # out_flat[b, p, co*no + q] == P[b, co, p, q]
    return out_flat.reshape(B, no, ho, no).transpose(0, 2, 1, 3)


def init_bimap_parameter(key, ho, hi, ni, no, dtype=jnp.float32):
    """Deterministic Stiefel init: each W[co, ci] is a (ni, no) semi-orthogonal
    matrix (W^T W = I), mirroring functional.init_bimap_parameter."""
    a = jax.random.normal(key, (ho, hi, ni, ni), dtype=jnp.float32)
    q, _ = jnp.linalg.qr(a)              # (ho, hi, ni, ni), orthonormal columns
    return q[..., :no].astype(dtype)     # first `no` columns -> (ho, hi, ni, no)


def make_spd_batch(key, batch, hi, ni, dtype=jnp.float32):
    """Deterministic batch of SPD matrices: A A^T + eps I."""
    a = jax.random.normal(key, (batch, hi, ni, ni), dtype=jnp.float32)
    spd = jnp.einsum("bcij,bckj->bcik", a, a) + 1e-3 * jnp.eye(ni, dtype=jnp.float32)
    return spd.astype(dtype)


if __name__ == "__main__":
    # Small shapes consistent with the module: ho=4, hi=3, ni=16, no=8, batch=2.
    batch, ho, hi, ni, no = 2, 4, 3, 16, 8

    key = jax.random.PRNGKey(0)
    kx, kw = jax.random.split(key)

    X = make_spd_batch(kx, batch, hi, ni)          # (2, 3, 16, 16)
    W = init_bimap_parameter(kw, ho, hi, ni, no)   # (4, 3, 16, 8)

    P = bimap_channels(X, W)
    P = jax.block_until_ready(P)

    # Pure-JAX reference: P[b,co] = sum_ci W[co,ci]^T X[b,ci] W[co,ci]
    P_ref = jnp.einsum("ocip,bcij,ocjq->bopq", W, X, W)

    assert P.shape == (batch, ho, no, no), P.shape
    assert jnp.allclose(P, P_ref, rtol=1e-4, atol=1e-4), (
        float(jnp.max(jnp.abs(P - P_ref)))
    )

    print("KERNEL_OK")
</pallas_src>

<mosaic_0001>
module attributes {stable_mosaic.version = 11 : i64} {
  func.func @_bimap_kernel(%arg0: i32, %arg1: memref<2x3x16x16xf32, #tpu.memory_space<vmem>>, %arg2: memref<4x3x16x8xf32, #tpu.memory_space<vmem>>, %arg3: memref<2x8x32xf32, #tpu.memory_space<vmem>>) attributes {dimension_semantics = [#tpu.dimension_semantics<parallel>], iteration_bounds = array<i64: 1>, scalar_prefetch = 0 : i64, scratch_operands = 0 : i64, tpu.core_type = #tpu.core_type<tc>, window_params = [{transform_indices = @transform_0, window_bounds = array<i64: 2, 3, 16, 16>}, {pipeline_mode = #tpu.pipeline_mode<synchronous>, transform_indices = @transform_1, window_bounds = array<i64: 4, 3, 16, 8>}, {transform_indices = @transform_2, window_bounds = array<i64: 2, 8, 32>}]} {
    %c0 = arith.constant 0 : index
    %c0_0 = arith.constant 0 : index
    %c0_1 = arith.constant 0 : index
    %c0_2 = arith.constant 0 : index
    %0 = vector.load %arg1[%c0, %c0_0, %c0_1, %c0_2] : memref<2x3x16x16xf32, #tpu.memory_space<vmem>>, vector<1x3x16x16xf32>
    %1 = vector.shape_cast %0 : vector<1x3x16x16xf32> to vector<3x16x16xf32>
    %c0_3 = arith.constant 0 : index
    %c0_4 = arith.constant 0 : index
    %c0_5 = arith.constant 0 : index
    %c0_6 = arith.constant 0 : index
    %2 = vector.load %arg2[%c0_3, %c0_4, %c0_5, %c0_6] : memref<4x3x16x8xf32, #tpu.memory_space<vmem>>, vector<1x3x16x8xf32>
    %3 = vector.shape_cast %2 : vector<1x3x16x8xf32> to vector<3x16x8xf32>
    %cst = arith.constant dense<0.000000e+00> : vector<3x16x8xf32>
    %4 = tpu.matmul %1, %3, %cst {dimension_numbers = #tpu.dot_dimension_numbers<[2], [1], [1], [2], [0, 0, 0, 1, 1, 2], [0], [0]>} : vector<3x16x16xf32>, vector<3x16x8xf32>, vector<3x16x8xf32> -> vector<3x16x8xf32>
    %5 = vector.shape_cast %3 : vector<3x16x8xf32> to vector<48x8xf32>
    %6 = vector.shape_cast %4 : vector<3x16x8xf32> to vector<48x8xf32>
    %cst_7 = arith.constant dense<0.000000e+00> : vector<8x8xf32>
    %7 = tpu.matmul %5, %6, %cst_7 {dimension_numbers = #tpu.dot_dimension_numbers<[0], [0], [1], [1], [0, 1, 1, 1], [], []>} : vector<48x8xf32>, vector<48x8xf32>, vector<8x8xf32> -> vector<8x8xf32>
    %c1 = arith.constant 1 : index
    %c0_8 = arith.constant 0 : index
    %c0_9 = arith.constant 0 : index
    %c0_10 = arith.constant 0 : index
    %8 = vector.load %arg2[%c1, %c0_8, %c0_9, %c0_10] : memref<4x3x16x8xf32, #tpu.memory_space<vmem>>, vector<1x3x16x8xf32>
    %9 = vector.shape_cast %8 : vector<1x3x16x8xf32> to vector<3x16x8xf32>
    %cst_11 = arith.constant dense<0.000000e+00> : vector<3x16x8xf32>
    %10 = tpu.matmul %1, %9, %cst_11 {dimension_numbers = #tpu.dot_dimension_numbers<[2], [1], [1], [2], [0, 0, 0, 1, 1, 2], [0], [0]>} : vector<3x16x16xf32>, vector<3x16x8xf32>, vector<3x16x8xf32> -> vector<3x16x8xf32>
    %11 = vector.shape_cast %9 : vector<3x16x8xf32> to vector<48x8xf32>
    %12 = vector.shape_cast %10 : vector<3x16x8xf32> to vector<48x8xf32>
    %cst_12 = arith.constant dense<0.000000e+00> : vector<8x8xf32>
    %13 = tpu.matmul %11, %12, %cst_12 {dimension_numbers = #tpu.dot_dimension_numbers<[0], [0], [1], [1], [0, 1, 1, 1], [], []>} : vector<48x8xf32>, vector<48x8xf32>, vector<8x8xf32> -> vector<8x8xf32>
    %c2 = arith.constant 2 : index
    %c0_13 = arith.constant 0 : index
    %c0_14 = arith.constant 0 : index
    %c0_15 = arith.constant 0 : index
    %14 = vector.load %arg2[%c2, %c0_13, %c0_14, %c0_15] : memref<4x3x16x8xf32, #tpu.memory_space<vmem>>, vector<1x3x16x8xf32>
    %15 = vector.shape_cast %14 : vector<1x3x16x8xf32> to vector<3x16x8xf32>
    %cst_16 = arith.constant dense<0.000000e+00> : vector<3x16x8xf32>
    %16 = tpu.matmul %1, %15, %cst_16 {dimension_numbers = #tpu.dot_dimension_numbers<[2], [1], [1], [2], [0, 0, 0, 1, 1, 2], [0], [0]>} : vector<3x16x16xf32>, vector<3x16x8xf32>, vector<3x16x8xf32> -> vector<3x16x8xf32>
    %17 = vector.shape_cast %15 : vector<3x16x8xf32> to vector<48x8xf32>
    %18 = vector.shape_cast %16 : vector<3x16x8xf32> to vector<48x8xf32>
    %cst_17 = arith.constant dense<0.000000e+00> : vector<8x8xf32>
    %19 = tpu.matmul %17, %18, %cst_17 {dimension_numbers = #tpu.dot_dimension_numbers<[0], [0], [1], [1], [0, 1, 1, 1], [], []>} : vector<48x8xf32>, vector<48x8xf32>, vector<8x8xf32> -> vector<8x8xf32>
    %c3 = arith.constant 3 : index
    %c0_18 = arith.constant 0 : index
    %c0_19 = arith.constant 0 : index
    %c0_20 = arith.constant 0 : index
    %20 = vector.load %arg2[%c3, %c0_18, %c0_19, %c0_20] : memref<4x3x16x8xf32, #tpu.memory_space<vmem>>, vector<1x3x16x8xf32>
    %21 = vector.shape_cast %20 : vector<1x3x16x8xf32> to vector<3x16x8xf32>
    %cst_21 = arith.constant dense<0.000000e+00> : vector<3x16x8xf32>
    %22 = tpu.matmul %1, %21, %cst_21 {dimension_numbers = #tpu.dot_dimension_numbers<[2], [1], [1], [2], [0, 0, 0, 1, 1, 2], [0], [0]>} : vector<3x16x16xf32>, vector<3x16x8xf32>, vector<3x16x8xf32> -> vector<3x16x8xf32>
    %23 = vector.shape_cast %21 : vector<3x16x8xf32> to vector<48x8xf32>
    %24 = vector.shape_cast %22 : vector<3x16x8xf32> to vector<48x8xf32>
    %cst_22 = arith.constant dense<0.000000e+00> : vector<8x8xf32>
    %25 = tpu.matmul %23, %24, %cst_22 {dimension_numbers = #tpu.dot_dimension_numbers<[0], [0], [1], [1], [0, 1, 1, 1], [], []>} : vector<48x8xf32>, vector<48x8xf32>, vector<8x8xf32> -> vector<8x8xf32>
    %26 = tpu.concatenate %7, %13, %19, %25 in 1 : vector<8x8xf32>, vector<8x8xf32>, vector<8x8xf32>, vector<8x8xf32> -> vector<8x32xf32>
    %c1_23 = arith.constant 1 : index
    %c0_24 = arith.constant 0 : index
    %c0_25 = arith.constant 0 : index
    %c0_26 = arith.constant 0 : index
    %27 = vector.load %arg1[%c1_23, %c0_24, %c0_25, %c0_26] : memref<2x3x16x16xf32, #tpu.memory_space<vmem>>, vector<1x3x16x16xf32>
    %28 = vector.shape_cast %27 : vector<1x3x16x16xf32> to vector<3x16x16xf32>
    %c0_27 = arith.constant 0 : index
    %c0_28 = arith.constant 0 : index
    %c0_29 = arith.constant 0 : index
    %c0_30 = arith.constant 0 : index
    %29 = vector.load %arg2[%c0_27, %c0_28, %c0_29, %c0_30] : memref<4x3x16x8xf32, #tpu.memory_space<vmem>>, vector<1x3x16x8xf32>
    %30 = vector.shape_cast %29 : vector<1x3x16x8xf32> to vector<3x16x8xf32>
    %cst_31 = arith.constant dense<0.000000e+00> : vector<3x16x8xf32>
    %31 = tpu.matmul %28, %30, %cst_31 {dimension_numbers = #tpu.dot_dimension_numbers<[2], [1], [1], [2], [0, 0, 0, 1, 1, 2], [0], [0]>} : vector<3x16x16xf32>, vector<3x16x8xf32>, vector<3x16x8xf32> -> vector<3x16x8xf32>
    %32 = vector.shape_cast %30 : vector<3x16x8xf32> to vector<48x8xf32>
    %33 = vector.shape_cast %31 : vector<3x16x8xf32> to vector<48x8xf32>
    %cst_32 = arith.constant dense<0.000000e+00> : vector<8x8xf32>
    %34 = tpu.matmul %32, %33, %cst_32 {dimension_numbers = #tpu.dot_dimension_numbers<[0], [0], [1], [1], [0, 1, 1, 1], [], []>} : vector<48x8xf32>, vector<48x8xf32>, vector<8x8xf32> -> vector<8x8xf32>
    %c1_33 = arith.constant 1 : index
    %c0_34 = arith.constant 0 : index
    %c0_35 = arith.constant 0 : index
    %c0_36 = arith.constant 0 : index
    %35 = vector.load %arg2[%c1_33, %c0_34, %c0_35, %c0_36] : memref<4x3x16x8xf32, #tpu.memory_space<vmem>>, vector<1x3x16x8xf32>
    %36 = vector.shape_cast %35 : vector<1x3x16x8xf32> to vector<3x16x8xf32>
    %cst_37 = arith.constant dense<0.000000e+00> : vector<3x16x8xf32>
    %37 = tpu.matmul %28, %36, %cst_37 {dimension_numbers = #tpu.dot_dimension_numbers<[2], [1], [1], [2], [0, 0, 0, 1, 1, 2], [0], [0]>} : vector<3x16x16xf32>, vector<3x16x8xf32>, vector<3x16x8xf32> -> vector<3x16x8xf32>
    %38 = vector.shape_cast %36 : vector<3x16x8xf32> to vector<48x8xf32>
    %39 = vector.shape_cast %37 : vector<3x16x8xf32> to vector<48x8xf32>
    %cst_38 = arith.constant dense<0.000000e+00> : vector<8x8xf32>
    %40 = tpu.matmul %38, %39, %cst_38 {dimension_numbers = #tpu.dot_dimension_numbers<[0], [0], [1], [1], [0, 1, 1, 1], [], []>} : vector<48x8xf32>, vector<48x8xf32>, vector<8x8xf32> -> vector<8x8xf32>
    %c2_39 = arith.constant 2 : index
    %c0_40 = arith.constant 0 : index
    %c0_41 = arith.constant 0 : index
    %c0_42 = arith.constant 0 : index
    %41 = vector.load %arg2[%c2_39, %c0_40, %c0_41, %c0_42] : memref<4x3x16x8xf32, #tpu.memory_space<vmem>>, vector<1x3x16x8xf32>
    %42 = vector.shape_cast %41 : vector<1x3x16x8xf32> to vector<3x16x8xf32>
    %cst_43 = arith.constant dense<0.000000e+00> : vector<3x16x8xf32>
    %43 = tpu.matmul %28, %42, %cst_43 {dimension_numbers = #tpu.dot_dimension_numbers<[2], [1], [1], [2], [0, 0, 0, 1, 1, 2], [0], [0]>} : vector<3x16x16xf32>, vector<3x16x8xf32>, vector<3x16x8xf32> -> vector<3x16x8xf32>
    %44 = vector.shape_cast %42 : vector<3x16x8xf32> to vector<48x8xf32>
    %45 = vector.shape_cast %43 : vector<3x16x8xf32> to vector<48x8xf32>
    %cst_44 = arith.constant dense<0.000000e+00> : vector<8x8xf32>
    %46 = tpu.matmul %44, %45, %cst_44 {dimension_numbers = #tpu.dot_dimension_numbers<[0], [0], [1], [1], [0, 1, 1, 1], [], []>} : vector<48x8xf32>, vector<48x8xf32>, vector<8x8xf32> -> vector<8x8xf32>
    %c3_45 = arith.constant 3 : index
    %c0_46 = arith.constant 0 : index
    %c0_47 = arith.constant 0 : index
    %c0_48 = arith.constant 0 : index
    %47 = vector.load %arg2[%c3_45, %c0_46, %c0_47, %c0_48] : memref<4x3x16x8xf32, #tpu.memory_space<vmem>>, vector<1x3x16x8xf32>
    %48 = vector.shape_cast %47 : vector<1x3x16x8xf32> to vector<3x16x8xf32>
    %cst_49 = arith.constant dense<0.000000e+00> : vector<3x16x8xf32>
    %49 = tpu.matmul %28, %48, %cst_49 {dimension_numbers = #tpu.dot_dimension_numbers<[2], [1], [1], [2], [0, 0, 0, 1, 1, 2], [0], [0]>} : vector<3x16x16xf32>, vector<3x16x8xf32>, vector<3x16x8xf32> -> vector<3x16x8xf32>
    %50 = vector.shape_cast %48 : vector<3x16x8xf32> to vector<48x8xf32>
    %51 = vector.shape_cast %49 : vector<3x16x8xf32> to vector<48x8xf32>
    %cst_50 = arith.constant dense<0.000000e+00> : vector<8x8xf32>
    %52 = tpu.matmul %50, %51, %cst_50 {dimension_numbers = #tpu.dot_dimension_numbers<[0], [0], [1], [1], [0, 1, 1, 1], [], []>} : vector<48x8xf32>, vector<48x8xf32>, vector<8x8xf32> -> vector<8x8xf32>
    %53 = tpu.concatenate %34, %40, %46, %52 in 1 : vector<8x8xf32>, vector<8x8xf32>, vector<8x8xf32>, vector<8x8xf32> -> vector<8x32xf32>
    %54 = vector.shape_cast %26 : vector<8x32xf32> to vector<1x8x32xf32>
    %55 = vector.shape_cast %53 : vector<8x32xf32> to vector<1x8x32xf32>
    %56 = tpu.concatenate %54, %55 in 0 : vector<1x8x32xf32>, vector<1x8x32xf32> -> vector<2x8x32xf32>
    %c0_51 = arith.constant 0 : index
    %c0_52 = arith.constant 0 : index
    %c0_53 = arith.constant 0 : index
    %57 = vector.load %arg3[%c0_51, %c0_52, %c0_53] : memref<2x8x32xf32, #tpu.memory_space<vmem>>, vector<2x8x32xf32>
    tpu.vector_store %arg3[%c0_51, %c0_52, %c0_53], %56 {strides = array<i32>} : memref<2x8x32xf32, #tpu.memory_space<vmem>>, vector<2x8x32xf32>,
    return
  }
  func.func @transform_0(%arg0: i32) -> (i32, i32, i32, i32) {
    %c0_i32 = arith.constant 0 : i32
    %c0_i32_0 = arith.constant 0 : i32
    %c0_i32_1 = arith.constant 0 : i32
    %c0_i32_2 = arith.constant 0 : i32
    return %arg0, %c0_i32, %c0_i32_0, %c0_i32_1 : i32, i32, i32, i32
  }
  func.func @transform_1(%arg0: i32) -> (i32, i32, i32, i32) {
    %c0_i32 = arith.constant 0 : i32
    %c0_i32_0 = arith.constant 0 : i32
    %c0_i32_1 = arith.constant 0 : i32
    %c0_i32_2 = arith.constant 0 : i32
    %c0_i32_3 = arith.constant 0 : i32
    return %c0_i32, %c0_i32_0, %c0_i32_1, %c0_i32_2 : i32, i32, i32, i32
  }
  func.func @transform_2(%arg0: i32) -> (i32, i32, i32) {
    %c0_i32 = arith.constant 0 : i32
    %c0_i32_0 = arith.constant 0 : i32
    %c0_i32_1 = arith.constant 0 : i32
    return %arg0, %c0_i32, %c0_i32_0 : i32, i32, i32
  }
}

</mosaic_0001>

<llo_original>
// kernel: tpu_custom_call.1
$region0: #{tpu_custom_call.1}
  #allocation0 [shape = 'u32[]', space=smem, size = 0x4, offset = 0x4, fixed_abs, tag = 'smem constant byte address 0x4 - core index']
  #allocation1 [shape = 'u32[144,128]{1,0:T(1,128)}', space=vmem, size = 0x12000, scoped, tag = 'internal scratch']
  %s0 = inlined_call_operand.vmem [shape: f32[2,3,16,16], index: 0, kind: input, shape index: {}]
  %s1 = inlined_call_operand.vmem [shape: f32[4,3,16,8], index: 1, kind: input, shape index: {}]
  %s2 = inlined_call_operand.hbm [shape: f32[2,8,32], index: 2, kind: output, shape index: {}]
  %s3 = sld [smem:[#allocation0]]
  $region18: #{tpu_custom_call.1} parent=0
    _
  %s5 = ssub.s32 1, %s3
  %s6 = scalar_select 0, %s5, %s3
  $region1: #{tpu_custom_call.1} parent=0
    #allocation2 [shape = 'u8[8192]{0}', space=vmem, size = 0x2000, scoped, tag = 'output window, operand 0, single buffered']
    #allocation3 [shape = 's32[1]{0}', space=sflag, size = 0x4, scoped, tag = 'scoped memory for tpu_custom_call.1']
    %7 = vsyncpa [#allocation3], 0
    // Predicated region
    $region2: #{tpu_custom_call.1} parent=1 // pred_check
      _
    $region3: #{tpu_custom_call.1} parent=1 // pred_check_branch
      %9 = sbr.rel (0) target = $region5
    $region4: #{tpu_custom_call.1} parent=1 // pred_region
      _
    $region5: #{tpu_custom_call.1} parent=1 // pred_fallthru
      _
    // Predicated region
    $region6: #{tpu_custom_call.1} parent=1 // pred_check
      _
    $region7: #{tpu_custom_call.1} parent=1 // pred_check_branch
      %11 = sbr.rel (0) target = $region9
    $region8: #{tpu_custom_call.1} parent=1 // pred_region
      _
    $region9: #{tpu_custom_call.1} parent=1 // pred_fallthru
      _
    %v12 = vld [vmem:[%s0] sm:$0xff]
    %v13 = vld [vmem:[%s0 + $0x8] sm:$0xff]
    %v14 = vld [vmem:[%s0 + $0x10] sm:$0xff]
    %v15 = vld [vmem:[%s0 + $0x18] sm:$0xff]
    %v16 = vld [vmem:[%s0 + $0x20] sm:$0xff]
    %v17 = vld [vmem:[%s0 + $0x28] sm:$0xff]
    %v18 = vld [vmem:[%s1] sm:$0xff]
    %v19 = vld [vmem:[%s1 + $0x8] sm:$0xff]
    %v20 = vld [vmem:[%s1 + $0x10] sm:$0xff]
    %v21 = vld [vmem:[%s1 + $0x18] sm:$0xff]
    %v22 = vld [vmem:[%s1 + $0x20] sm:$0xff]
    %v23 = vld [vmem:[%s1 + $0x28] sm:$0xff]
    %vm24 = vcmask 130048
    %v26 = vsel %vm24, %v12, 0
    %v29 = vsel %vm24, %v13, 0
    %31 = vmatprep.subr.mxu0 0.0
    %32 = vmatpush1.msra.mxu0 0.0
    %33 = vmatprep.subr.mxu0 0.0
    %34 = vmatpush1.msra.mxu0 0.0
    %35 = vmatprep.subr.mxu0 0.0
    %36 = vmatpush1.msra.mxu0 0.0
    %37 = vmatprep.subr.mxu0 0.0
    %38 = vmatpush1.msra.mxu0 0.0
    %39 = vmatprep.subr.mxu0 0.0
    %40 = vmatpush1.msra.mxu0 0.0
    %41 = vmatprep.subr.mxu0 0.0
    %42 = vmatpush1.msra.mxu0 0.0
    %43 = vmatprep.subr.mxu0 0.0
    %44 = vmatpush1.msra.mxu0 0.0
    %45 = vmatprep.subr.mxu0 0.0
    %46 = vmatpush1.msra.mxu0 0.0
    %47 = vmatprep.subr.mxu0 0.0
    %48 = vmatpush1.msra.mxu0 0.0
    %49 = vmatprep.subr.mxu0 0.0
    %50 = vmatpush1.msra.mxu0 0.0
    %51 = vmatprep.subr.mxu0 0.0
    %52 = vmatpush1.msra.mxu0 0.0
    %53 = vmatprep.subr.mxu0 0.0
    %54 = vmatpush1.msra.mxu0 0.0
    %55 = vmatprep.subr.mxu0 0.0
    %56 = vmatpush1.msra.mxu0 0.0
    %57 = vmatprep.subr.mxu0 0.0
    %58 = vmatpush1.msra.mxu0 0.0
    %59 = vmatprep.subr.mxu0 0.0
    %60 = vmatpush1.msra.mxu0 %v19
    %61 = vmatprep.subr.mxu0 0.0
    %62 = vmatpush1.msra.mxu0 %v18
    %63 = vmatprep.subr.mxu0 0.0
    %64 = vmatpush2.msra.mxu0 0.0
    %65 = vmatprep.subr.mxu0 0.0
    %66 = vmatpush2.msra.mxu0 0.0
    %67 = vmatprep.subr.mxu0 0.0
    %68 = vmatpush2.msra.mxu0 0.0
    %69 = vmatprep.subr.mxu0 0.0
    %70 = vmatpush2.msra.mxu0 0.0
    %71 = vmatprep.subr.mxu0 0.0
    %72 = vmatpush2.msra.mxu0 0.0
    %73 = vmatprep.subr.mxu0 0.0
    %74 = vmatpush2.msra.mxu0 0.0
    %75 = vmatprep.subr.mxu0 0.0
    %76 = vmatpush2.msra.mxu0 0.0
    %77 = vmatprep.subr.mxu0 0.0
    %78 = vmatpush2.msra.mxu0 0.0
    %79 = vmatprep.subr.mxu0 0.0
    %80 = vmatpush2.msra.mxu0 0.0
    %81 = vmatprep.subr.mxu0 0.0
    %82 = vmatpush2.msra.mxu0 0.0
    %83 = vmatprep.subr.mxu0 0.0
    %84 = vmatpush2.msra.mxu0 0.0
    %85 = vmatprep.subr.mxu0 0.0
    %86 = vmatpush2.msra.mxu0 0.0
    %87 = vmatprep.subr.mxu0 0.0
    %88 = vmatpush2.msra.mxu0 0.0
    %89 = vmatprep.subr.mxu0 0.0
    %90 = vmatpush2.msra.mxu0 0.0
    %91 = vmatprep.subr.mxu0 0.0
    %92 = vmatpush2.msra.mxu0 0.0
    %93 = vmatprep.subr.mxu0 0.0
    %94 = vmatpush2.msra.mxu0 0.0
    %95 = vmatprep.mubr.f32.mxu0 0.0
    %96 = vmatmul.mubr.f32.gmra.mxu0 %v26
    %v97 = vpop.f32.mrf.mxu0
    %v98 = vadd.f32 0.0, %v97
    %v99 = vpop.f32.mrf.mxu0
    %100 = vmatprep.mubr.f32.mxu0 0.0
    %101 = vmatmul.mubr.f32.gmra.mxu0 %v29
    %v102 = vpop.f32.mrf.mxu0
    %v103 = vadd.f32 0.0, %v102
    %v104 = vpop.f32.mrf.mxu0
    %105 = vdwg.mxu0
    %v107 = vsel %vm24, %v14, 0
    %v110 = vsel %vm24, %v15, 0
    %112 = vmatprep.subr.mxu0 0.0
    %113 = vmatpush1.msra.mxu0 0.0
    %114 = vmatprep.subr.mxu0 0.0
    %115 = vmatpush1.msra.mxu0 0.0
    %116 = vmatprep.subr.mxu0 0.0
    %117 = vmatpush1.msra.mxu0 0.0
    %118 = vmatprep.subr.mxu0 0.0
    %119 = vmatpush1.msra.mxu0 0.0
    %120 = vmatprep.subr.mxu0 0.0
    %121 = vmatpush1.msra.mxu0 0.0
    %122 = vmatprep.subr.mxu0 0.0
    %123 = vmatpush1.msra.mxu0 0.0
    %124 = vmatprep.subr.mxu0 0.0
    %125 = vmatpush1.msra.mxu0 0.0
    %126 = vmatprep.subr.mxu0 0.0
    %127 = vmatpush1.msra.mxu0 0.0
    %128 = vmatprep.subr.mxu0 0.0
    %129 = vmatpush1.msra.mxu0 0.0
    %130 = vmatprep.subr.mxu0 0.0
    %131 = vmatpush1.msra.mxu0 0.0
    %132 = vmatprep.subr.mxu0 0.0
    %133 = vmatpush1.msra.mxu0 0.0
    %134 = vmatprep.subr.mxu0 0.0
    %135 = vmatpush1.msra.mxu0 0.0
    %136 = vmatprep.subr.mxu0 0.0
    %137 = vmatpush1.msra.mxu0 0.0
    %138 = vmatprep.subr.mxu0 0.0
    %139 = vmatpush1.msra.mxu0 0.0
    %140 = vmatprep.subr.mxu0 0.0
    %141 = vmatpush1.msra.mxu0 %v21
    %142 = vmatprep.subr.mxu0 0.0
    %143 = vmatpush1.msra.mxu0 %v20
    %144 = vmatprep.subr.mxu0 0.0
    %145 = vmatpush2.msra.mxu0 0.0
    %146 = vmatprep.subr.mxu0 0.0
    %147 = vmatpush2.msra.mxu0 0.0
    %148 = vmatprep.subr.mxu0 0.0
    %149 = vmatpush2.msra.mxu0 0.0
    %150 = vmatprep.subr.mxu0 0.0
    %151 = vmatpush2.msra.mxu0 0.0
    %152 = vmatprep.subr.mxu0 0.0
    %153 = vmatpush2.msra.mxu0 0.0
    %154 = vmatprep.subr.mxu0 0.0
    %155 = vmatpush2.msra.mxu0 0.0
    %156 = vmatprep.subr.mxu0 0.0
    %157 = vmatpush2.msra.mxu0 0.0
    %158 = vmatprep.subr.mxu0 0.0
    %159 = vmatpush2.msra.mxu0 0.0
    %160 = vmatprep.subr.mxu0 0.0
    %161 = vmatpush2.msra.mxu0 0.0
    %162 = vmatprep.subr.mxu0 0.0
    %163 = vmatpush2.msra.mxu0 0.0
    %164 = vmatprep.subr.mxu0 0.0
    %165 = vmatpush2.msra.mxu0 0.0
    %166 = vmatprep.subr.mxu0 0.0
    %167 = vmatpush2.msra.mxu0 0.0
    %168 = vmatprep.subr.mxu0 0.0
    %169 = vmatpush2.msra.mxu0 0.0
    %170 = vmatprep.subr.mxu0 0.0
    %171 = vmatpush2.msra.mxu0 0.0
    %172 = vmatprep.subr.mxu0 0.0
    %173 = vmatpush2.msra.mxu0 0.0
    %174 = vmatprep.subr.mxu0 0.0
    %175 = vmatpush2.msra.mxu0 0.0
    %176 = vmatprep.mubr.f32.mxu0 0.0
    %177 = vmatmul.mubr.f32.gmra.mxu0 %v107
    %v178 = vpop.f32.mrf.mxu0
    %v179 = vadd.f32 0.0, %v178
    %v180 = vpop.f32.mrf.mxu0
    %181 = vmatprep.mubr.f32.mxu0 0.0
    %182 = vmatmul.mubr.f32.gmra.mxu0 %v110
    %v183 = vpop.f32.mrf.mxu0
    %v184 = vadd.f32 0.0, %v183
    %v185 = vpop.f32.mrf.mxu0
    %186 = vdwg.mxu0
    %v188 = vsel %vm24, %v16, 0
    %v191 = vsel %vm24, %v17, 0
    %193 = vmatprep.subr.mxu0 0.0
    %194 = vmatpush1.msra.mxu0 0.0
    %195 = vmatprep.subr.mxu0 0.0
    %196 = vmatpush1.msra.mxu0 0.0
    %197 = vmatprep.subr.mxu0 0.0
    %198 = vmatpush1.msra.mxu0 0.0
    %199 = vmatprep.subr.mxu0 0.0
    %200 = vmatpush1.msra.mxu0 0.0
    %201 = vmatprep.subr.mxu0 0.0
    %202 = vmatpush1.msra.mxu0 0.0
    %203 = vmatprep.subr.mxu0 0.0
    %204 = vmatpush1.msra.mxu0 0.0
    %205 = vmatprep.subr.mxu0 0.0
    %206 = vmatpush1.msra.mxu0 0.0
    %207 = vmatprep.subr.mxu0 0.0
    %208 = vmatpush1.msra.mxu0 0.0
    %209 = vmatprep.subr.mxu0 0.0
    %210 = vmatpush1.msra.mxu0 0.0
    %211 = vmatprep.subr.mxu0 0.0
    %212 = vmatpush1.msra.mxu0 0.0
    %213 = vmatprep.subr.mxu0 0.0
    %214 = vmatpush1.msra.mxu0 0.0
    %215 = vmatprep.subr.mxu0 0.0
    %216 = vmatpush1.msra.mxu0 0.0
    %217 = vmatprep.subr.mxu0 0.0
    %218 = vmatpush1.msra.mxu0 0.0
    %219 = vmatprep.subr.mxu0 0.0
    %220 = vmatpush1.msra.mxu0 0.0
    %221 = vmatprep.subr.mxu0 0.0
    %222 = vmatpush1.msra.mxu0 %v23
    %223 = vmatprep.subr.mxu0 0.0
    %224 = vmatpush1.msra.mxu0 %v22
    %225 = vmatprep.subr.mxu0 0.0
    %226 = vmatpush2.msra.mxu0 0.0
    %227 = vmatprep.subr.mxu0 0.0
    %228 = vmatpush2.msra.mxu0 0.0
    %229 = vmatprep.subr.mxu0 0.0
    %230 = vmatpush2.msra.mxu0 0.0
    %231 = vmatprep.subr.mxu0 0.0
    %232 = vmatpush2.msra.mxu0 0.0
    %233 = vmatprep.subr.mxu0 0.0
    %234 = vmatpush2.msra.mxu0 0.0
    %235 = vmatprep.subr.mxu0 0.0
    %236 = vmatpush2.msra.mxu0 0.0
    %237 = vmatprep.subr.mxu0 0.0
    %238 = vmatpush2.msra.mxu0 0.0
    %239 = vmatprep.subr.mxu0 0.0
    %240 = vmatpush2.msra.mxu0 0.0
    %241 = vmatprep.subr.mxu0 0.0
    %242 = vmatpush2.msra.mxu0 0.0
    %243 = vmatprep.subr.mxu0 0.0
    %244 = vmatpush2.msra.mxu0 0.0
    %245 = vmatprep.subr.mxu0 0.0
    %246 = vmatpush2.msra.mxu0 0.0
    %247 = vmatprep.subr.mxu0 0.0
    %248 = vmatpush2.msra.mxu0 0.0
    %249 = vmatprep.subr.mxu0 0.0
    %250 = vmatpush2.msra.mxu0 0.0
    %251 = vmatprep.subr.mxu0 0.0
    %252 = vmatpush2.msra.mxu0 0.0
    %253 = vmatprep.subr.mxu0 0.0
    %254 = vmatpush2.msra.mxu0 0.0
    %255 = vmatprep.subr.mxu0 0.0
    %256 = vmatpush2.msra.mxu0 0.0
    %257 = vmatprep.mubr.f32.mxu0 0.0
    %258 = vmatmul.mubr.f32.gmra.mxu0 %v188
    %v259 = vpop.f32.mrf.mxu0
    %v260 = vadd.f32 0.0, %v259
    %v261 = vpop.f32.mrf.mxu0
    %262 = vmatprep.mubr.f32.mxu0 0.0
    %263 = vmatmul.mubr.f32.gmra.mxu0 %v191
    %v264 = vpop.f32.mrf.mxu0
    %v265 = vadd.f32 0.0, %v264
    %v266 = vpop.f32.mrf.mxu0
    %267 = vdwg.mxu0
    %268 = vxpose.xlu0.b32.start [1/16] %v18, 128
    %269 = vxpose.xlu0.b32.cont [2/16] %v19, 128
    %270 = vxpose.xlu0.b32.cont [3/16] %v20, 128
    %271 = vxpose.xlu0.b32.cont [4/16] %v21, 128
    %272 = vxpose.xlu0.b32.cont [5/16] %v22, 128
    %273 = vxpose.xlu0.b32.cont [6/16] %v23, 128
    %274 = vxpose.xlu0.b32.cont [7/16] 0.0, 128
    %275 = vxpose.xlu0.b32.cont [8/16] 0.0, 128
    %276 = vxpose.xlu0.b32.cont [9/16] 0.0, 128
    %277 = vxpose.xlu0.b32.cont [10/16] 0.0, 128
    %278 = vxpose.xlu0.b32.cont [11/16] 0.0, 128
    %279 = vxpose.xlu0.b32.cont [12/16] 0.0, 128
    %280 = vxpose.xlu0.b32.cont [13/16] 0.0, 128
    %281 = vxpose.xlu0.b32.cont [14/16] 0.0, 128
    %282 = vxpose.xlu0.b32.cont [15/16] 0.0, 128
    %283 = vxpose.xlu0.b32.end [16/16] 0.0, 128
    %v284 = vpop.trf.xlu0
    %v285 = vpop.trf.xlu0
    %v286 = vpop.trf.xlu0
    %v287 = vpop.trf.xlu0
    %v288 = vpop.trf.xlu0
    %v289 = vpop.trf.xlu0
    %v290 = vpop.trf.xlu0
    %v291 = vpop.trf.xlu0
    %v292 = vpop.trf.xlu0
    %v293 = vpop.trf.xlu0
    %v294 = vpop.trf.xlu0
    %v295 = vpop.trf.xlu0
    %v296 = vpop.trf.xlu0
    %v297 = vpop.trf.xlu0
    %v298 = vpop.trf.xlu0
    %v299 = vpop.trf.xlu0
    %vm300 = vcmask 392192
    %v302 = vsel %vm300, %v284, 0
    %304 = vmatprep.subr.mxu0 0.0
    %305 = vmatpush1.msra.mxu0 0.0
    %306 = vmatprep.subr.mxu0 0.0
    %307 = vmatpush1.msra.mxu0 0.0
    %308 = vmatprep.subr.mxu0 0.0
    %309 = vmatpush1.msra.mxu0 0.0
    %310 = vmatprep.subr.mxu0 0.0
    %311 = vmatpush1.msra.mxu0 0.0
    %312 = vmatprep.subr.mxu0 0.0
    %313 = vmatpush1.msra.mxu0 0.0
    %314 = vmatprep.subr.mxu0 0.0
    %315 = vmatpush1.msra.mxu0 0.0
    %316 = vmatprep.subr.mxu0 0.0
    %317 = vmatpush1.msra.mxu0 0.0
    %318 = vmatprep.subr.mxu0 0.0
    %319 = vmatpush1.msra.mxu0 0.0
    %320 = vmatprep.subr.mxu0 0.0
    %321 = vmatpush1.msra.mxu0 0.0
    %322 = vmatprep.subr.mxu0 0.0
    %323 = vmatpush1.msra.mxu0 0.0
    %324 = vmatprep.subr.mxu0 0.0
    %325 = vmatpush1.msra.mxu0 %v265
    %326 = vmatprep.subr.mxu0 0.0
    %327 = vmatpush1.msra.mxu0 %v260
    %328 = vmatprep.subr.mxu0 0.0
    %329 = vmatpush1.msra.mxu0 %v184
    %330 = vmatprep.subr.mxu0 0.0
    %331 = vmatpush1.msra.mxu0 %v179
    %332 = vmatprep.subr.mxu0 0.0
    %333 = vmatpush1.msra.mxu0 %v103
    %334 = vmatprep.subr.mxu0 0.0
    %335 = vmatpush1.msra.mxu0 %v98
    %336 = vmatprep.subr.mxu0 0.0
    %337 = vmatpush2.msra.mxu0 0.0
    %338 = vmatprep.subr.mxu0 0.0
    %339 = vmatpush2.msra.mxu0 0.0
    %340 = vmatprep.subr.mxu0 0.0
    %341 = vmatpush2.msra.mxu0 0.0
    %342 = vmatprep.subr.mxu0 0.0
    %343 = vmatpush2.msra.mxu0 0.0
    %344 = vmatprep.subr.mxu0 0.0
    %345 = vmatpush2.msra.mxu0 0.0
    %346 = vmatprep.subr.mxu0 0.0
    %347 = vmatpush2.msra.mxu0 0.0
    %348 = vmatprep.subr.mxu0 0.0
    %349 = vmatpush2.msra.mxu0 0.0
    %350 = vmatprep.subr.mxu0 0.0
    %351 = vmatpush2.msra.mxu0 0.0
    %352 = vmatprep.subr.mxu0 0.0
    %353 = vmatpush2.msra.mxu0 0.0
    %354 = vmatprep.subr.mxu0 0.0
    %355 = vmatpush2.msra.mxu0 0.0
    %356 = vmatprep.subr.mxu0 0.0
    %357 = vmatpush2.msra.mxu0 0.0
    %358 = vmatprep.subr.mxu0 0.0
    %359 = vmatpush2.msra.mxu0 0.0
    %360 = vmatprep.subr.mxu0 0.0
    %361 = vmatpush2.msra.mxu0 0.0
    %362 = vmatprep.subr.mxu0 0.0
    %363 = vmatpush2.msra.mxu0 0.0
    %364 = vmatprep.subr.mxu0 0.0
    %365 = vmatpush2.msra.mxu0 0.0
    %366 = vmatprep.subr.mxu0 0.0
    %367 = vmatpush2.msra.mxu0 0.0
    %368 = vmatprep.mubr.f32.mxu0 0.0
    %369 = vmatmul.mubr.f32.gmra.mxu0 %v302
    %v370 = vpop.f32.mrf.mxu0
    %v371 = vadd.f32 0.0, %v370
    %v372 = vpop.f32.mrf.mxu0
    %373 = vdwg.mxu0
    %s374 = scalar_lea.vmem %s1, 48
    %v375 = vld [vmem:[%s374] sm:$0xff]
    %v376 = vld [vmem:[%s374 + $0x8] sm:$0xff]
    %v377 = vld [vmem:[%s374 + $0x10] sm:$0xff]
    %v378 = vld [vmem:[%s374 + $0x18] sm:$0xff]
    %v379 = vld [vmem:[%s374 + $0x20] sm:$0xff]
    %v380 = vld [vmem:[%s374 + $0x28] sm:$0xff]
    %381 = vmatprep.subr.mxu0 0.0
    %382 = vmatpush1.msra.mxu0 0.0
    %383 = vmatprep.subr.mxu0 0.0
    %384 = vmatpush1.msra.mxu0 0.0
    %385 = vmatprep.subr.mxu0 0.0
    %386 = vmatpush1.msra.mxu0 0.0
    %387 = vmatprep.subr.mxu0 0.0
    %388 = vmatpush1.msra.mxu0 0.0
    %389 = vmatprep.subr.mxu0 0.0
    %390 = vmatpush1.msra.mxu0 0.0
    %391 = vmatprep.subr.mxu0 0.0
    %392 = vmatpush1.msra.mxu0 0.0
    %393 = vmatprep.subr.mxu0 0.0
    %394 = vmatpush1.msra.mxu0 0.0
    %395 = vmatprep.subr.mxu0 0.0
    %396 = vmatpush1.msra.mxu0 0.0
    %397 = vmatprep.subr.mxu0 0.0
    %398 = vmatpush1.msra.mxu0 0.0
    %399 = vmatprep.subr.mxu0 0.0
    %400 = vmatpush1.msra.mxu0 0.0
    %401 = vmatprep.subr.mxu0 0.0
    %402 = vmatpush1.msra.mxu0 0.0
    %403 = vmatprep.subr.mxu0 0.0
    %404 = vmatpush1.msra.mxu0 0.0
    %405 = vmatprep.subr.mxu0 0.0
    %406 = vmatpush1.msra.mxu0 0.0
    %407 = vmatprep.subr.mxu0 0.0
    %408 = vmatpush1.msra.mxu0 0.0
    %409 = vmatprep.subr.mxu0 0.0
    %410 = vmatpush1.msra.mxu0 %v376
    %411 = vmatprep.subr.mxu0 0.0
    %412 = vmatpush1.msra.mxu0 %v375
    %413 = vmatprep.subr.mxu0 0.0
    %414 = vmatpush2.msra.mxu0 0.0
    %415 = vmatprep.subr.mxu0 0.0
    %416 = vmatpush2.msra.mxu0 0.0
    %417 = vmatprep.subr.mxu0 0.0
    %418 = vmatpush2.msra.mxu0 0.0
    %419 = vmatprep.subr.mxu0 0.0
    %420 = vmatpush2.msra.mxu0 0.0
    %421 = vmatprep.subr.mxu0 0.0
    %422 = vmatpush2.msra.mxu0 0.0
    %423 = vmatprep.subr.mxu0 0.0
    %424 = vmatpush2.msra.mxu0 0.0
    %425 = vmatprep.subr.mxu0 0.0
    %426 = vmatpush2.msra.mxu0 0.0
    %427 = vmatprep.subr.mxu0 0.0
    %428 = vmatpush2.msra.mxu0 0.0
    %429 = vmatprep.subr.mxu0 0.0
    %430 = vmatpush2.msra.mxu0 0.0
    %431 = vmatprep.subr.mxu0 0.0
    %432 = vmatpush2.msra.mxu0 0.0
    %433 = vmatprep.subr.mxu0 0.0
    %434 = vmatpush2.msra.mxu0 0.0
    %435 = vmatprep.subr.mxu0 0.0
    %436 = vmatpush2.msra.mxu0 0.0
    %437 = vmatprep.subr.mxu0 0.0
    %438 = vmatpush2.msra.mxu0 0.0
    %439 = vmatprep.subr.mxu0 0.0
    %440 = vmatpush2.msra.mxu0 0.0
    %441 = vmatprep.subr.mxu0 0.0
    %442 = vmatpush2.msra.mxu0 0.0
    %443 = vmatprep.subr.mxu0 0.0
    %444 = vmatpush2.msra.mxu0 0.0
    %445 = vmatprep.mubr.f32.mxu0 0.0
    %446 = vmatmul.mubr.f32.gmra.mxu0 %v26
    %v447 = vpop.f32.mrf.mxu0
    %v448 = vadd.f32 0.0, %v447
    %v449 = vpop.f32.mrf.mxu0
    %450 = vmatprep.mubr.f32.mxu0 0.0
    %451 = vmatmul.mubr.f32.gmra.mxu0 %v29
    %v452 = vpop.f32.mrf.mxu0
    %v453 = vadd.f32 0.0, %v452
    %v454 = vpop.f32.mrf.mxu0
    %455 = vdwg.mxu0
    %456 = vmatprep.subr.mxu0 0.0
    %457 = vmatpush1.msra.mxu0 0.0
    %458 = vmatprep.subr.mxu0 0.0
    %459 = vmatpush1.msra.mxu0 0.0
    %460 = vmatprep.subr.mxu0 0.0
    %461 = vmatpush1.msra.mxu0 0.0
    %462 = vmatprep.subr.mxu0 0.0
    %463 = vmatpush1.msra.mxu0 0.0
    %464 = vmatprep.subr.mxu0 0.0
    %465 = vmatpush1.msra.mxu0 0.0
    %466 = vmatprep.subr.mxu0 0.0
    %467 = vmatpush1.msra.mxu0 0.0
    %468 = vmatprep.subr.mxu0 0.0
    %469 = vmatpush1.msra.mxu0 0.0
    %470 = vmatprep.subr.mxu0 0.0
    %471 = vmatpush1.msra.mxu0 0.0
    %472 = vmatprep.subr.mxu0 0.0
    %473 = vmatpush1.msra.mxu0 0.0
    %474 = vmatprep.subr.mxu0 0.0
    %475 = vmatpush1.msra.mxu0 0.0
    %476 = vmatprep.subr.mxu0 0.0
    %477 = vmatpush1.msra.mxu0 0.0
    %478 = vmatprep.subr.mxu0 0.0
    %479 = vmatpush1.msra.mxu0 0.0
    %480 = vmatprep.subr.mxu0 0.0
    %481 = vmatpush1.msra.mxu0 0.0
    %482 = vmatprep.subr.mxu0 0.0
    %483 = vmatpush1.msra.mxu0 0.0
    %484 = vmatprep.subr.mxu0 0.0
    %485 = vmatpush1.msra.mxu0 %v378
    %486 = vmatprep.subr.mxu0 0.0
    %487 = vmatpush1.msra.mxu0 %v377
    %488 = vmatprep.subr.mxu0 0.0
    %489 = vmatpush2.msra.mxu0 0.0
    %490 = vmatprep.subr.mxu0 0.0
    %491 = vmatpush2.msra.mxu0 0.0
    %492 = vmatprep.subr.mxu0 0.0
    %493 = vmatpush2.msra.mxu0 0.0
    %494 = vmatprep.subr.mxu0 0.0
    %495 = vmatpush2.msra.mxu0 0.0
    %496 = vmatprep.subr.mxu0 0.0
    %497 = vmatpush2.msra.mxu0 0.0
    %498 = vmatprep.subr.mxu0 0.0
    %499 = vmatpush2.msra.mxu0 0.0
    %500 = vmatprep.subr.mxu0 0.0
    %501 = vmatpush2.msra.mxu0 0.0
    %502 = vmatprep.subr.mxu0 0.0
    %503 = vmatpush2.msra.mxu0 0.0
    %504 = vmatprep.subr.mxu0 0.0
    %505 = vmatpush2.msra.mxu0 0.0
    %506 = vmatprep.subr.mxu0 0.0
    %507 = vmatpush2.msra.mxu0 0.0
    %508 = vmatprep.subr.mxu0 0.0
    %509 = vmatpush2.msra.mxu0 0.0
    %510 = vmatprep.subr.mxu0 0.0
    %511 = vmatpush2.msra.mxu0 0.0
    %512 = vmatprep.subr.mxu0 0.0
    %513 = vmatpush2.msra.mxu0 0.0
    %514 = vmatprep.subr.mxu0 0.0
    %515 = vmatpush2.msra.mxu0 0.0
    %516 = vmatprep.subr.mxu0 0.0
    %517 = vmatpush2.msra.mxu0 0.0
    %518 = vmatprep.subr.mxu0 0.0
    %519 = vmatpush2.msra.mxu0 0.0
    %520 = vmatprep.mubr.f32.mxu0 0.0
    %521 = vmatmul.mubr.f32.gmra.mxu0 %v107
    %v522 = vpop.f32.mrf.mxu0
    %v523 = vadd.f32 0.0, %v522
    %v524 = vpop.f32.mrf.mxu0
    %525 = vmatprep.mubr.f32.mxu0 0.0
    %526 = vmatmul.mubr.f32.gmra.mxu0 %v110
    %v527 = vpop.f32.mrf.mxu0
    %v528 = vadd.f32 0.0, %v527
    %v529 = vpop.f32.mrf.mxu0
    %530 = vdwg.mxu0
    %531 = vmatprep.subr.mxu0 0.0
    %532 = vmatpush1.msra.mxu0 0.0
    %533 = vmatprep.subr.mxu0 0.0
    %534 = vmatpush1.msra.mxu0 0.0
    %535 = vmatprep.subr.mxu0 0.0
    %536 = vmatpush1.msra.mxu0 0.0
    %537 = vmatprep.subr.mxu0 0.0
    %538 = vmatpush1.msra.mxu0 0.0
    %539 = vmatprep.subr.mxu0 0.0
    %540 = vmatpush1.msra.mxu0 0.0
    %541 = vmatprep.subr.mxu0 0.0
    %542 = vmatpush1.msra.mxu0 0.0
    %543 = vmatprep.subr.mxu0 0.0
    %544 = vmatpush1.msra.mxu0 0.0
    %545 = vmatprep.subr.mxu0 0.0
    %546 = vmatpush1.msra.mxu0 0.0
    %547 = vmatprep.subr.mxu0 0.0
    %548 = vmatpush1.msra.mxu0 0.0
    %549 = vmatprep.subr.mxu0 0.0
    %550 = vmatpush1.msra.mxu0 0.0
    %551 = vmatprep.subr.mxu0 0.0
    %552 = vmatpush1.msra.mxu0 0.0
    %553 = vmatprep.subr.mxu0 0.0
    %554 = vmatpush1.msra.mxu0 0.0
    %555 = vmatprep.subr.mxu0 0.0
    %556 = vmatpush1.msra.mxu0 0.0
    %557 = vmatprep.subr.mxu0 0.0
    %558 = vmatpush1.msra.mxu0 0.0
    %559 = vmatprep.subr.mxu0 0.0
    %560 = vmatpush1.msra.mxu0 %v380
    %561 = vmatprep.subr.mxu0 0.0
    %562 = vmatpush1.msra.mxu0 %v379
    %563 = vmatprep.subr.mxu0 0.0
    %564 = vmatpush2.msra.mxu0 0.0
    %565 = vmatprep.subr.mxu0 0.0
    %566 = vmatpush2.msra.mxu0 0.0
    %567 = vmatprep.subr.mxu0 0.0
    %568 = vmatpush2.msra.mxu0 0.0
    %569 = vmatprep.subr.mxu0 0.0
    %570 = vmatpush2.msra.mxu0 0.0
    %571 = vmatprep.subr.mxu0 0.0
    %572 = vmatpush2.msra.mxu0 0.0
    %573 = vmatprep.subr.mxu0 0.0
    %574 = vmatpush2.msra.mxu0 0.0
    %575 = vmatprep.subr.mxu0 0.0
    %576 = vmatpush2.msra.mxu0 0.0
    %577 = vmatprep.subr.mxu0 0.0
    %578 = vmatpush2.msra.mxu0 0.0
    %579 = vmatprep.subr.mxu0 0.0
    %580 = vmatpush2.msra.mxu0 0.0
    %581 = vmatprep.subr.mxu0 0.0
    %582 = vmatpush2.msra.mxu0 0.0
    %583 = vmatprep.subr.mxu0 0.0
    %584 = vmatpush2.msra.mxu0 0.0
    %585 = vmatprep.subr.mxu0 0.0
    %586 = vmatpush2.msra.mxu0 0.0
    %587 = vmatprep.subr.mxu0 0.0
    %588 = vmatpush2.msra.mxu0 0.0
    %589 = vmatprep.subr.mxu0 0.0
    %590 = vmatpush2.msra.mxu0 0.0
    %591 = vmatprep.subr.mxu0 0.0
    %592 = vmatpush2.msra.mxu0 0.0
    %593 = vmatprep.subr.mxu0 0.0
    %594 = vmatpush2.msra.mxu0 0.0
    %595 = vmatprep.mubr.f32.mxu0 0.0
    %596 = vmatmul.mubr.f32.gmra.mxu0 %v188
    %v597 = vpop.f32.mrf.mxu0
    %v598 = vadd.f32 0.0, %v597
    %v599 = vpop.f32.mrf.mxu0
    %600 = vmatprep.mubr.f32.mxu0 0.0
    %601 = vmatmul.mubr.f32.gmra.mxu0 %v191
    %v602 = vpop.f32.mrf.mxu0
    %v603 = vadd.f32 0.0, %v602
    %v604 = vpop.f32.mrf.mxu0
    %605 = vdwg.mxu0
    %606 = vxpose.xlu0.b32.start [1/16] %v375, 128
    %607 = vxpose.xlu0.b32.cont [2/16] %v376, 128
    %608 = vxpose.xlu0.b32.cont [3/16] %v377, 128
    %609 = vxpose.xlu0.b32.cont [4/16] %v378, 128
    %610 = vxpose.xlu0.b32.cont [5/16] %v379, 128
    %611 = vxpose.xlu0.b32.cont [6/16] %v380, 128
    %612 = vxpose.xlu0.b32.cont [7/16] 0.0, 128
    %613 = vxpose.xlu0.b32.cont [8/16] 0.0, 128
    %614 = vxpose.xlu0.b32.cont [9/16] 0.0, 128
    %615 = vxpose.xlu0.b32.cont [10/16] 0.0, 128
    %616 = vxpose.xlu0.b32.cont [11/16] 0.0, 128
    %617 = vxpose.xlu0.b32.cont [12/16] 0.0, 128
    %618 = vxpose.xlu0.b32.cont [13/16] 0.0, 128
    %619 = vxpose.xlu0.b32.cont [14/16] 0.0, 128
    %620 = vxpose.xlu0.b32.cont [15/16] 0.0, 128
    %621 = vxpose.xlu0.b32.end [16/16] 0.0, 128
    %v622 = vpop.trf.xlu0
    %v623 = vpop.trf.xlu0
    %v624 = vpop.trf.xlu0
    %v625 = vpop.trf.xlu0
    %v626 = vpop.trf.xlu0
    %v627 = vpop.trf.xlu0
    %v628 = vpop.trf.xlu0
    %v629 = vpop.trf.xlu0
    %v630 = vpop.trf.xlu0
    %v631 = vpop.trf.xlu0
    %v632 = vpop.trf.xlu0
    %v633 = vpop.trf.xlu0
    %v634 = vpop.trf.xlu0
    %v635 = vpop.trf.xlu0
    %v636 = vpop.trf.xlu0
    %v637 = vpop.trf.xlu0
    %v639 = vsel %vm300, %v622, 0
    %641 = vmatprep.subr.mxu0 0.0
    %642 = vmatpush1.msra.mxu0 0.0
    %643 = vmatprep.subr.mxu0 0.0
    %644 = vmatpush1.msra.mxu0 0.0
    %645 = vmatprep.subr.mxu0 0.0
    %646 = vmatpush1.msra.mxu0 0.0
    %647 = vmatprep.subr.mxu0 0.0
    %648 = vmatpush1.msra.mxu0 0.0
    %649 = vmatprep.subr.mxu0 0.0
    %650 = vmatpush1.msra.mxu0 0.0
    %651 = vmatprep.subr.mxu0 0.0
    %652 = vmatpush1.msra.mxu0 0.0
    %653 = vmatprep.subr.mxu0 0.0
    %654 = vmatpush1.msra.mxu0 0.0
    %655 = vmatprep.subr.mxu0 0.0
    %656 = vmatpush1.msra.mxu0 0.0
    %657 = vmatprep.subr.mxu0 0.0
    %658 = vmatpush1.msra.mxu0 0.0
    %659 = vmatprep.subr.mxu0 0.0
    %660 = vmatpush1.msra.mxu0 0.0
    %661 = vmatprep.subr.mxu0 0.0
    %662 = vmatpush1.msra.mxu0 %v603
    %663 = vmatprep.subr.mxu0 0.0
    %664 = vmatpush1.msra.mxu0 %v598
    %665 = vmatprep.subr.mxu0 0.0
    %666 = vmatpush1.msra.mxu0 %v528
    %667 = vmatprep.subr.mxu0 0.0
    %668 = vmatpush1.msra.mxu0 %v523
    %669 = vmatprep.subr.mxu0 0.0
    %670 = vmatpush1.msra.mxu0 %v453
    %671 = vmatprep.subr.mxu0 0.0
    %672 = vmatpush1.msra.mxu0 %v448
    %673 = vmatprep.subr.mxu0 0.0
    %674 = vmatpush2.msra.mxu0 0.0
    %675 = vmatprep.subr.mxu0 0.0
    %676 = vmatpush2.msra.mxu0 0.0
    %677 = vmatprep.subr.mxu0 0.0
    %678 = vmatpush2.msra.mxu0 0.0
    %679 = vmatprep.subr.mxu0 0.0
    %680 = vmatpush2.msra.mxu0 0.0
    %681 = vmatprep.subr.mxu0 0.0
    %682 = vmatpush2.msra.mxu0 0.0
    %683 = vmatprep.subr.mxu0 0.0
    %684 = vmatpush2.msra.mxu0 0.0
    %685 = vmatprep.subr.mxu0 0.0
    %686 = vmatpush2.msra.mxu0 0.0
    %687 = vmatprep.subr.mxu0 0.0
    %688 = vmatpush2.msra.mxu0 0.0
    %689 = vmatprep.subr.mxu0 0.0
    %690 = vmatpush2.msra.mxu0 0.0
    %691 = vmatprep.subr.mxu0 0.0
    %692 = vmatpush2.msra.mxu0 0.0
    %693 = vmatprep.subr.mxu0 0.0
    %694 = vmatpush2.msra.mxu0 0.0
    %695 = vmatprep.subr.mxu0 0.0
    %696 = vmatpush2.msra.mxu0 0.0
    %697 = vmatprep.subr.mxu0 0.0
    %698 = vmatpush2.msra.mxu0 0.0
    %699 = vmatprep.subr.mxu0 0.0
    %700 = vmatpush2.msra.mxu0 0.0
    %701 = vmatprep.subr.mxu0 0.0
    %702 = vmatpush2.msra.mxu0 0.0
    %703 = vmatprep.subr.mxu0 0.0
    %704 = vmatpush2.msra.mxu0 0.0
    %705 = vmatprep.mubr.f32.mxu0 0.0
    %706 = vmatmul.mubr.f32.gmra.mxu0 %v639
    %v707 = vpop.f32.mrf.mxu0
    %v708 = vadd.f32 0.0, %v707
    %v709 = vpop.f32.mrf.mxu0
    %710 = vdwg.mxu0
    %s711 = scalar_lea.vmem %s1, 96
    %v712 = vld [vmem:[%s711] sm:$0xff]
    %v713 = vld [vmem:[%s711 + $0x8] sm:$0xff]
    %v714 = vld [vmem:[%s711 + $0x10] sm:$0xff]
    %v715 = vld [vmem:[%s711 + $0x18] sm:$0xff]
    %v716 = vld [vmem:[%s711 + $0x20] sm:$0xff]
    %v717 = vld [vmem:[%s711 + $0x28] sm:$0xff]
    %718 = vmatprep.subr.mxu0 0.0
    %719 = vmatpush1.msra.mxu0 0.0
    %720 = vmatprep.subr.mxu0 0.0
    %721 = vmatpush1.msra.mxu0 0.0
    %722 = vmatprep.subr.mxu0 0.0
    %723 = vmatpush1.msra.mxu0 0.0
    %724 = vmatprep.subr.mxu0 0.0
    %725 = vmatpush1.msra.mxu0 0.0
    %726 = vmatprep.subr.mxu0 0.0
    %727 = vmatpush1.msra.mxu0 0.0
    %728 = vmatprep.subr.mxu0 0.0
    %729 = vmatpush1.msra.mxu0 0.0
    %730 = vmatprep.subr.mxu0 0.0
    %731 = vmatpush1.msra.mxu0 0.0
    %732 = vmatprep.subr.mxu0 0.0
    %733 = vmatpush1.msra.mxu0 0.0
    %734 = vmatprep.subr.mxu0 0.0
    %735 = vmatpush1.msra.mxu0 0.0
    %736 = vmatprep.subr.mxu0 0.0
    %737 = vmatpush1.msra.mxu0 0.0
    %738 = vmatprep.subr.mxu0 0.0
    %739 = vmatpush1.msra.mxu0 0.0
    %740 = vmatprep.subr.mxu0 0.0
    %741 = vmatpush1.msra.mxu0 0.0
    %742 = vmatprep.subr.mxu0 0.0
    %743 = vmatpush1.msra.mxu0 0.0
    %744 = vmatprep.subr.mxu0 0.0
    %745 = vmatpush1.msra.mxu0 0.0
    %746 = vmatprep.subr.mxu0 0.0
    %747 = vmatpush1.msra.mxu0 %v713
    %748 = vmatprep.subr.mxu0 0.0
    %749 = vmatpush1.msra.mxu0 %v712
    %750 = vmatprep.subr.mxu0 0.0
    %751 = vmatpush2.msra.mxu0 0.0
    %752 = vmatprep.subr.mxu0 0.0
    %753 = vmatpush2.msra.mxu0 0.0
    %754 = vmatprep.subr.mxu0 0.0
    %755 = vmatpush2.msra.mxu0 0.0
    %756 = vmatprep.subr.mxu0 0.0
    %757 = vmatpush2.msra.mxu0 0.0
    %758 = vmatprep.subr.mxu0 0.0
    %759 = vmatpush2.msra.mxu0 0.0
    %760 = vmatprep.subr.mxu0 0.0
    %761 = vmatpush2.msra.mxu0 0.0
    %762 = vmatprep.subr.mxu0 0.0
    %763 = vmatpush2.msra.mxu0 0.0
    %764 = vmatprep.subr.mxu0 0.0
    %765 = vmatpush2.msra.mxu0 0.0
    %766 = vmatprep.subr.mxu0 0.0
    %767 = vmatpush2.msra.mxu0 0.0
    %768 = vmatprep.subr.mxu0 0.0
    %769 = vmatpush2.msra.mxu0 0.0
    %770 = vmatprep.subr.mxu0 0.0
    %771 = vmatpush2.msra.mxu0 0.0
    %772 = vmatprep.subr.mxu0 0.0
    %773 = vmatpush2.msra.mxu0 0.0
    %774 = vmatprep.subr.mxu0 0.0
    %775 = vmatpush2.msra.mxu0 0.0
    %776 = vmatprep.subr.mxu0 0.0
    %777 = vmatpush2.msra.mxu0 0.0
    %778 = vmatprep.subr.mxu0 0.0
    %779 = vmatpush2.msra.mxu0 0.0
    %780 = vmatprep.subr.mxu0 0.0
    %781 = vmatpush2.msra.mxu0 0.0
    %782 = vmatprep.mubr.f32.mxu0 0.0
    %783 = vmatmul.mubr.f32.gmra.mxu0 %v26
    %v784 = vpop.f32.mrf.mxu0
    %v785 = vadd.f32 0.0, %v784
    %v786 = vpop.f32.mrf.mxu0
    %787 = vmatprep.mubr.f32.mxu0 0.0
    %788 = vmatmul.mubr.f32.gmra.mxu0 %v29
    %v789 = vpop.f32.mrf.mxu0
    %v790 = vadd.f32 0.0, %v789
    %v791 = vpop.f32.mrf.mxu0
    %792 = vdwg.mxu0
    %793 = vmatprep.subr.mxu0 0.0
    %794 = vmatpush1.msra.mxu0 0.0
    %795 = vmatprep.subr.mxu0 0.0
    %796 = vmatpush1.msra.mxu0 0.0
    %797 = vmatprep.subr.mxu0 0.0
    %798 = vmatpush1.msra.mxu0 0.0
    %799 = vmatprep.subr.mxu0 0.0
    %800 = vmatpush1.msra.mxu0 0.0
    %801 = vmatprep.subr.mxu0 0.0
    %802 = vmatpush1.msra.mxu0 0.0
    %803 = vmatprep.subr.mxu0 0.0
    %804 = vmatpush1.msra.mxu0 0.0
    %805 = vmatprep.subr.mxu0 0.0
    %806 = vmatpush1.msra.mxu0 0.0
    %807 = vmatprep.subr.mxu0 0.0
    %808 = vmatpush1.msra.mxu0 0.0
    %809 = vmatprep.subr.mxu0 0.0
    %810 = vmatpush1.msra.mxu0 0.0
    %811 = vmatprep.subr.mxu0 0.0
    %812 = vmatpush1.msra.mxu0 0.0
    %813 = vmatprep.subr.mxu0 0.0
    %814 = vmatpush1.msra.mxu0 0.0
    %815 = vmatprep.subr.mxu0 0.0
    %816 = vmatpush1.msra.mxu0 0.0
    %817 = vmatprep.subr.mxu0 0.0
    %818 = vmatpush1.msra.mxu0 0.0
    %819 = vmatprep.subr.mxu0 0.0
    %820 = vmatpush1.msra.mxu0 0.0
    %821 = vmatprep.subr.mxu0 0.0
    %822 = vmatpush1.msra.mxu0 %v715
    %823 = vmatprep.subr.mxu0 0.0
    %824 = vmatpush1.msra.mxu0 %v714
    %825 = vmatprep.subr.mxu0 0.0
    %826 = vmatpush2.msra.mxu0 0.0
    %827 = vmatprep.subr.mxu0 0.0
    %828 = vmatpush2.msra.mxu0 0.0
    %829 = vmatprep.subr.mxu0 0.0
    %830 = vmatpush2.msra.mxu0 0.0
    %831 = vmatprep.subr.mxu0 0.0
    %832 = vmatpush2.msra.mxu0 0.0
    %833 = vmatprep.subr.mxu0 0.0
    %834 = vmatpush2.msra.mxu0 0.0
    %835 = vmatprep.subr.mxu0 0.0
    %836 = vmatpush2.msra.mxu0 0.0
    %837 = vmatprep.subr.mxu0 0.0
    %838 = vmatpush2.msra.mxu0 0.0
    %839 = vmatprep.subr.mxu0 0.0
    %840 = vmatpush2.msra.mxu0 0.0
    %841 = vmatprep.subr.mxu0 0.0
    %842 = vmatpush2.msra.mxu0 0.0
    %843 = vmatprep.subr.mxu0 0.0
    %844 = vmatpush2.msra.mxu0 0.0
    %845 = vmatprep.subr.mxu0 0.0
    %846 = vmatpush2.msra.mxu0 0.0
    %847 = vmatprep.subr.mxu0 0.0
    %848 = vmatpush2.msra.mxu0 0.0
    %849 = vmatprep.subr.mxu0 0.0
    %850 = vmatpush2.msra.mxu0 0.0
    %851 = vmatprep.subr.mxu0 0.0
    %852 = vmatpush2.msra.mxu0 0.0
    %853 = vmatprep.subr.mxu0 0.0
    %854 = vmatpush2.msra.mxu0 0.0
    %855 = vmatprep.subr.mxu0 0.0
    %856 = vmatpush2.msra.mxu0 0.0
    %857 = vmatprep.mubr.f32.mxu0 0.0
    %858 = vmatmul.mubr.f32.gmra.mxu0 %v107
    %v859 = vpop.f32.mrf.mxu0
    %v860 = vadd.f32 0.0, %v859
    %v861 = vpop.f32.mrf.mxu0
    %862 = vmatprep.mubr.f32.mxu0 0.0
    %863 = vmatmul.mubr.f32.gmra.mxu0 %v110
    %v864 = vpop.f32.mrf.mxu0
    %v865 = vadd.f32 0.0, %v864
    %v866 = vpop.f32.mrf.mxu0
    %867 = vdwg.mxu0
    %868 = vmatprep.subr.mxu0 0.0
    %869 = vmatpush1.msra.mxu0 0.0
    %870 = vmatprep.subr.mxu0 0.0
    %871 = vmatpush1.msra.mxu0 0.0
    %872 = vmatprep.subr.mxu0 0.0
    %873 = vmatpush1.msra.mxu0 0.0
    %874 = vmatprep.subr.mxu0 0.0
    %875 = vmatpush1.msra.mxu0 0.0
    %876 = vmatprep.subr.mxu0 0.0
    %877 = vmatpush1.msra.mxu0 0.0
    %878 = vmatprep.subr.mxu0 0.0
    %879 = vmatpush1.msra.mxu0 0.0
    %880 = vmatprep.subr.mxu0 0.0
    %881 = vmatpush1.msra.mxu0 0.0
    %882 = vmatprep.subr.mxu0 0.0
    %883 = vmatpush1.msra.mxu0 0.0
    %884 = vmatprep.subr.mxu0 0.0
    %885 = vmatpush1.msra.mxu0 0.0
    %886 = vmatprep.subr.mxu0 0.0
    %887 = vmatpush1.msra.mxu0 0.0
    %888 = vmatprep.subr.mxu0 0.0
    %889 = vmatpush1.msra.mxu0 0.0
    %890 = vmatprep.subr.mxu0 0.0
    %891 = vmatpush1.msra.mxu0 0.0
    %892 = vmatprep.subr.mxu0 0.0
    %893 = vmatpush1.msra.mxu0 0.0
    %894 = vmatprep.subr.mxu0 0.0
    %895 = vmatpush1.msra.mxu0 0.0
    %896 = vmatprep.subr.mxu0 0.0
    %897 = vmatpush1.msra.mxu0 %v717
    %898 = vmatprep.subr.mxu0 0.0
    %899 = vmatpush1.msra.mxu0 %v716
    %900 = vmatprep.subr.mxu0 0.0
    %901 = vmatpush2.msra.mxu0 0.0
    %902 = vmatprep.subr.mxu0 0.0
    %903 = vmatpush2.msra.mxu0 0.0
    %904 = vmatprep.subr.mxu0 0.0
    %905 = vmatpush2.msra.mxu0 0.0
    %906 = vmatprep.subr.mxu0 0.0
    %907 = vmatpush2.msra.mxu0 0.0
    %908 = vmatprep.subr.mxu0 0.0
    %909 = vmatpush2.msra.mxu0 0.0
    %910 = vmatprep.subr.mxu0 0.0
    %911 = vmatpush2.msra.mxu0 0.0
    %912 = vmatprep.subr.mxu0 0.0
    %913 = vmatpush2.msra.mxu0 0.0
    %914 = vmatprep.subr.mxu0 0.0
    %915 = vmatpush2.msra.mxu0 0.0
    %916 = vmatprep.subr.mxu0 0.0
    %917 = vmatpush2.msra.mxu0 0.0
    %918 = vmatprep.subr.mxu0 0.0
    %919 = vmatpush2.msra.mxu0 0.0
    %920 = vmatprep.subr.mxu0 0.0
    %921 = vmatpush2.msra.mxu0 0.0
    %922 = vmatprep.subr.mxu0 0.0
    %923 = vmatpush2.msra.mxu0 0.0
    %924 = vmatprep.subr.mxu0 0.0
    %925 = vmatpush2.msra.mxu0 0.0
    %926 = vmatprep.subr.mxu0 0.0
    %927 = vmatpush2.msra.mxu0 0.0
    %928 = vmatprep.subr.mxu0 0.0
    %929 = vmatpush2.msra.mxu0 0.0
    %930 = vmatprep.subr.mxu0 0.0
    %931 = vmatpush2.msra.mxu0 0.0
    %932 = vmatprep.mubr.f32.mxu0 0.0
    %933 = vmatmul.mubr.f32.gmra.mxu0 %v188
    %v934 = vpop.f32.mrf.mxu0
    %v935 = vadd.f32 0.0, %v934
    %v936 = vpop.f32.mrf.mxu0
    %937 = vmatprep.mubr.f32.mxu0 0.0
    %938 = vmatmul.mubr.f32.gmra.mxu0 %v191
    %v939 = vpop.f32.mrf.mxu0
    %v940 = vadd.f32 0.0, %v939
    %v941 = vpop.f32.mrf.mxu0
    %942 = vdwg.mxu0
    %943 = vxpose.xlu0.b32.start [1/16] %v712, 128
    %944 = vxpose.xlu0.b32.cont [2/16] %v713, 128
    %945 = vxpose.xlu0.b32.cont [3/16] %v714, 128
    %946 = vxpose.xlu0.b32.cont [4/16] %v715, 128
    %947 = vxpose.xlu0.b32.cont [5/16] %v716, 128
    %948 = vxpose.xlu0.b32.cont [6/16] %v717, 128
    %949 = vxpose.xlu0.b32.cont [7/16] 0.0, 128
    %950 = vxpose.xlu0.b32.cont [8/16] 0.0, 128
    %951 = vxpose.xlu0.b32.cont [9/16] 0.0, 128
    %952 = vxpose.xlu0.b32.cont [10/16] 0.0, 128
    %953 = vxpose.xlu0.b32.cont [11/16] 0.0, 128
    %954 = vxpose.xlu0.b32.cont [12/16] 0.0, 128
    %955 = vxpose.xlu0.b32.cont [13/16] 0.0, 128
    %956 = vxpose.xlu0.b32.cont [14/16] 0.0, 128
    %957 = vxpose.xlu0.b32.cont [15/16] 0.0, 128
    %958 = vxpose.xlu0.b32.end [16/16] 0.0, 128
    %v959 = vpop.trf.xlu0
    %v960 = vpop.trf.xlu0
    %v961 = vpop.trf.xlu0
    %v962 = vpop.trf.xlu0
    %v963 = vpop.trf.xlu0
    %v964 = vpop.trf.xlu0
    %v965 = vpop.trf.xlu0
    %v966 = vpop.trf.xlu0
    %v967 = vpop.trf.xlu0
    %v968 = vpop.trf.xlu0
    %v969 = vpop.trf.xlu0
    %v970 = vpop.trf.xlu0
    %v971 = vpop.trf.xlu0
    %v972 = vpop.trf.xlu0
    %v973 = vpop.trf.xlu0
    %v974 = vpop.trf.xlu0
    %v976 = vsel %vm300, %v959, 0
    %978 = vmatprep.subr.mxu0 0.0
    %979 = vmatpush1.msra.mxu0 0.0
    %980 = vmatprep.subr.mxu0 0.0
    %981 = vmatpush1.msra.mxu0 0.0
    %982 = vmatprep.subr.mxu0 0.0
    %983 = vmatpush1.msra.mxu0 0.0
    %984 = vmatprep.subr.mxu0 0.0
    %985 = vmatpush1.msra.mxu0 0.0
    %986 = vmatprep.subr.mxu0 0.0
    %987 = vmatpush1.msra.mxu0 0.0
    %988 = vmatprep.subr.mxu0 0.0
    %989 = vmatpush1.msra.mxu0 0.0
    %990 = vmatprep.subr.mxu0 0.0
    %991 = vmatpush1.msra.mxu0 0.0
    %992 = vmatprep.subr.mxu0 0.0
    %993 = vmatpush1.msra.mxu0 0.0
    %994 = vmatprep.subr.mxu0 0.0
    %995 = vmatpush1.msra.mxu0 0.0
    %996 = vmatprep.subr.mxu0 0.0
    %997 = vmatpush1.msra.mxu0 0.0
    %998 = vmatprep.subr.mxu0 0.0
    %999 = vmatpush1.msra.mxu0 %v940
    %1000 = vmatprep.subr.mxu0 0.0
    %1001 = vmatpush1.msra.mxu0 %v935
    %1002 = vmatprep.subr.mxu0 0.0
    %1003 = vmatpush1.msra.mxu0 %v865
    %1004 = vmatprep.subr.mxu0 0.0
    %1005 = vmatpush1.msra.mxu0 %v860
    %1006 = vmatprep.subr.mxu0 0.0
    %1007 = vmatpush1.msra.mxu0 %v790
    %1008 = vmatprep.subr.mxu0 0.0
    %1009 = vmatpush1.msra.mxu0 %v785
    %1010 = vmatprep.subr.mxu0 0.0
    %1011 = vmatpush2.msra.mxu0 0.0
    %1012 = vmatprep.subr.mxu0 0.0
    %1013 = vmatpush2.msra.mxu0 0.0
    %1014 = vmatprep.subr.mxu0 0.0
    %1015 = vmatpush2.msra.mxu0 0.0
    %1016 = vmatprep.subr.mxu0 0.0
    %1017 = vmatpush2.msra.mxu0 0.0
    %1018 = vmatprep.subr.mxu0 0.0
    %1019 = vmatpush2.msra.mxu0 0.0
    %1020 = vmatprep.subr.mxu0 0.0
    %1021 = vmatpush2.msra.mxu0 0.0
    %1022 = vmatprep.subr.mxu0 0.0
    %1023 = vmatpush2.msra.mxu0 0.0
    %1024 = vmatprep.subr.mxu0 0.0
    %1025 = vmatpush2.msra.mxu0 0.0
    %1026 = vmatprep.subr.mxu0 0.0
    %1027 = vmatpush2.msra.mxu0 0.0
    %1028 = vmatprep.subr.mxu0 0.0
    %1029 = vmatpush2.msra.mxu0 0.0
    %1030 = vmatprep.subr.mxu0 0.0
    %1031 = vmatpush2.msra.mxu0 0.0
    %1032 = vmatprep.subr.mxu0 0.0
    %1033 = vmatpush2.msra.mxu0 0.0
    %1034 = vmatprep.subr.mxu0 0.0
    %1035 = vmatpush2.msra.mxu0 0.0
    %1036 = vmatprep.subr.mxu0 0.0
    %1037 = vmatpush2.msra.mxu0 0.0
    %1038 = vmatprep.subr.mxu0 0.0
    %1039 = vmatpush2.msra.mxu0 0.0
    %1040 = vmatprep.subr.mxu0 0.0
    %1041 = vmatpush2.msra.mxu0 0.0
    %1042 = vmatprep.mubr.f32.mxu0 0.0
    %1043 = vmatmul.mubr.f32.gmra.mxu0 %v976
    %v1044 = vpop.f32.mrf.mxu0
    %v1045 = vadd.f32 0.0, %v1044
    %v1046 = vpop.f32.mrf.mxu0
    %1047 = vdwg.mxu0
    %s1048 = scalar_lea.vmem %s1, 144
    %v1049 = vld [vmem:[%s1048] sm:$0xff]
    %v1050 = vld [vmem:[%s1048 + $0x8] sm:$0xff]
    %v1051 = vld [vmem:[%s1048 + $0x10] sm:$0xff]
    %v1052 = vld [vmem:[%s1048 + $0x18] sm:$0xff]
    %v1053 = vld [vmem:[%s1048 + $0x20] sm:$0xff]
    %v1054 = vld [vmem:[%s1048 + $0x28] sm:$0xff]
    %1055 = vmatprep.subr.mxu0 0.0
    %1056 = vmatpush1.msra.mxu0 0.0
    %1057 = vmatprep.subr.mxu0 0.0
    %1058 = vmatpush1.msra.mxu0 0.0
    %1059 = vmatprep.subr.mxu0 0.0
    %1060 = vmatpush1.msra.mxu0 0.0
    %1061 = vmatprep.subr.mxu0 0.0
    %1062 = vmatpush1.msra.mxu0 0.0
    %1063 = vmatprep.subr.mxu0 0.0
    %1064 = vmatpush1.msra.mxu0 0.0
    %1065 = vmatprep.subr.mxu0 0.0
    %1066 = vmatpush1.msra.mxu0 0.0
    %1067 = vmatprep.subr.mxu0 0.0
    %1068 = vmatpush1.msra.mxu0 0.0
    %1069 = vmatprep.subr.mxu0 0.0
    %1070 = vmatpush1.msra.mxu0 0.0
    %1071 = vmatprep.subr.mxu0 0.0
    %1072 = vmatpush1.msra.mxu0 0.0
    %1073 = vmatprep.subr.mxu0 0.0
    %1074 = vmatpush1.msra.mxu0 0.0
    %1075 = vmatprep.subr.mxu0 0.0
    %1076 = vmatpush1.msra.mxu0 0.0
    %1077 = vmatprep.subr.mxu0 0.0
    %1078 = vmatpush1.msra.mxu0 0.0
    %1079 = vmatprep.subr.mxu0 0.0
    %1080 = vmatpush1.msra.mxu0 0.0
    %1081 = vmatprep.subr.mxu0 0.0
    %1082 = vmatpush1.msra.mxu0 0.0
    %1083 = vmatprep.subr.mxu0 0.0
    %1084 = vmatpush1.msra.mxu0 %v1050
    %1085 = vmatprep.subr.mxu0 0.0
    %1086 = vmatpush1.msra.mxu0 %v1049
    %1087 = vmatprep.subr.mxu0 0.0
    %1088 = vmatpush2.msra.mxu0 0.0
    %1089 = vmatprep.subr.mxu0 0.0
    %1090 = vmatpush2.msra.mxu0 0.0
    %1091 = vmatprep.subr.mxu0 0.0
    %1092 = vmatpush2.msra.mxu0 0.0
    %1093 = vmatprep.subr.mxu0 0.0
    %1094 = vmatpush2.msra.mxu0 0.0
    %1095 = vmatprep.subr.mxu0 0.0
    %1096 = vmatpush2.msra.mxu0 0.0
    %1097 = vmatprep.subr.mxu0 0.0
    %1098 = vmatpush2.msra.mxu0 0.0
    %1099 = vmatprep.subr.mxu0 0.0
    %1100 = vmatpush2.msra.mxu0 0.0
    %1101 = vmatprep.subr.mxu0 0.0
    %1102 = vmatpush2.msra.mxu0 0.0
    %1103 = vmatprep.subr.mxu0 0.0
    %1104 = vmatpush2.msra.mxu0 0.0
    %1105 = vmatprep.subr.mxu0 0.0
    %1106 = vmatpush2.msra.mxu0 0.0
    %1107 = vmatprep.subr.mxu0 0.0
    %1108 = vmatpush2.msra.mxu0 0.0
    %1109 = vmatprep.subr.mxu0 0.0
    %1110 = vmatpush2.msra.mxu0 0.0
    %1111 = vmatprep.subr.mxu0 0.0
    %1112 = vmatpush2.msra.mxu0 0.0
    %1113 = vmatprep.subr.mxu0 0.0
    %1114 = vmatpush2.msra.mxu0 0.0
    %1115 = vmatprep.subr.mxu0 0.0
    %1116 = vmatpush2.msra.mxu0 0.0
    %1117 = vmatprep.subr.mxu0 0.0
    %1118 = vmatpush2.msra.mxu0 0.0
    %1119 = vmatprep.mubr.f32.mxu0 0.0
    %1120 = vmatmul.mubr.f32.gmra.mxu0 %v26
    %v1121 = vpop.f32.mrf.mxu0
    %v1122 = vadd.f32 0.0, %v1121
    %v1123 = vpop.f32.mrf.mxu0
    %1124 = vmatprep.mubr.f32.mxu0 0.0
    %1125 = vmatmul.mubr.f32.gmra.mxu0 %v29
    %v1126 = vpop.f32.mrf.mxu0
    %v1127 = vadd.f32 0.0, %v1126
    %v1128 = vpop.f32.mrf.mxu0
    %1129 = vdwg.mxu0
    %1130 = vmatprep.subr.mxu0 0.0
    %1131 = vmatpush1.msra.mxu0 0.0
    %1132 = vmatprep.subr.mxu0 0.0
    %1133 = vmatpush1.msra.mxu0 0.0
    %1134 = vmatprep.subr.mxu0 0.0
    %1135 = vmatpush1.msra.mxu0 0.0
    %1136 = vmatprep.subr.mxu0 0.0
    %1137 = vmatpush1.msra.mxu0 0.0
    %1138 = vmatprep.subr.mxu0 0.0
    %1139 = vmatpush1.msra.mxu0 0.0
    %1140 = vmatprep.subr.mxu0 0.0
    %1141 = vmatpush1.msra.mxu0 0.0
    %1142 = vmatprep.subr.mxu0 0.0
    %1143 = vmatpush1.msra.mxu0 0.0
    %1144 = vmatprep.subr.mxu0 0.0
    %1145 = vmatpush1.msra.mxu0 0.0
    %1146 = vmatprep.subr.mxu0 0.0
    %1147 = vmatpush1.msra.mxu0 0.0
    %1148 = vmatprep.subr.mxu0 0.0
    %1149 = vmatpush1.msra.mxu0 0.0
    %1150 = vmatprep.subr.mxu0 0.0
    %1151 = vmatpush1.msra.mxu0 0.0
    %1152 = vmatprep.subr.mxu0 0.0
    %1153 = vmatpush1.msra.mxu0 0.0
    %1154 = vmatprep.subr.mxu0 0.0
    %1155 = vmatpush1.msra.mxu0 0.0
    %1156 = vmatprep.subr.mxu0 0.0
    %1157 = vmatpush1.msra.mxu0 0.0
    %1158 = vmatprep.subr.mxu0 0.0
    %1159 = vmatpush1.msra.mxu0 %v1052
    %1160 = vmatprep.subr.mxu0 0.0
    %1161 = vmatpush1.msra.mxu0 %v1051
    %1162 = vmatprep.subr.mxu0 0.0
    %1163 = vmatpush2.msra.mxu0 0.0
    %1164 = vmatprep.subr.mxu0 0.0
    %1165 = vmatpush2.msra.mxu0 0.0
    %1166 = vmatprep.subr.mxu0 0.0
    %1167 = vmatpush2.msra.mxu0 0.0
    %1168 = vmatprep.subr.mxu0 0.0
    %1169 = vmatpush2.msra.mxu0 0.0
    %1170 = vmatprep.subr.mxu0 0.0
    %1171 = vmatpush2.msra.mxu0 0.0
    %1172 = vmatprep.subr.mxu0 0.0
    %1173 = vmatpush2.msra.mxu0 0.0
    %1174 = vmatprep.subr.mxu0 0.0
    %1175 = vmatpush2.msra.mxu0 0.0
    %1176 = vmatprep.subr.mxu0 0.0
    %1177 = vmatpush2.msra.mxu0 0.0
    %1178 = vmatprep.subr.mxu0 0.0
    %1179 = vmatpush2.msra.mxu0 0.0
    %1180 = vmatprep.subr.mxu0 0.0
    %1181 = vmatpush2.msra.mxu0 0.0
    %1182 = vmatprep.subr.mxu0 0.0
    %1183 = vmatpush2.msra.mxu0 0.0
    %1184 = vmatprep.subr.mxu0 0.0
    %1185 = vmatpush2.msra.mxu0 0.0
    %1186 = vmatprep.subr.mxu0 0.0
    %1187 = vmatpush2.msra.mxu0 0.0
    %1188 = vmatprep.subr.mxu0 0.0
    %1189 = vmatpush2.msra.mxu0 0.0
    %1190 = vmatprep.subr.mxu0 0.0
    %1191 = vmatpush2.msra.mxu0 0.0
    %1192 = vmatprep.subr.mxu0 0.0
    %1193 = vmatpush2.msra.mxu0 0.0
    %1194 = vmatprep.mubr.f32.mxu0 0.0
    %1195 = vmatmul.mubr.f32.gmra.mxu0 %v107
    %v1196 = vpop.f32.mrf.mxu0
    %v1197 = vadd.f32 0.0, %v1196
    %v1198 = vpop.f32.mrf.mxu0
    %1199 = vmatprep.mubr.f32.mxu0 0.0
    %1200 = vmatmul.mubr.f32.gmra.mxu0 %v110
    %v1201 = vpop.f32.mrf.mxu0
    %v1202 = vadd.f32 0.0, %v1201
    %v1203 = vpop.f32.mrf.mxu0
    %1204 = vdwg.mxu0
    %1205 = vmatprep.subr.mxu0 0.0
    %1206 = vmatpush1.msra.mxu0 0.0
    %1207 = vmatprep.subr.mxu0 0.0
    %1208 = vmatpush1.msra.mxu0 0.0
    %1209 = vmatprep.subr.mxu0 0.0
    %1210 = vmatpush1.msra.mxu0 0.0
    %1211 = vmatprep.subr.mxu0 0.0
    %1212 = vmatpush1.msra.mxu0 0.0
    %1213 = vmatprep.subr.mxu0 0.0
    %1214 = vmatpush1.msra.mxu0 0.0
    %1215 = vmatprep.subr.mxu0 0.0
    %1216 = vmatpush1.msra.mxu0 0.0
    %1217 = vmatprep.subr.mxu0 0.0
    %1218 = vmatpush1.msra.mxu0 0.0
    %1219 = vmatprep.subr.mxu0 0.0
    %1220 = vmatpush1.msra.mxu0 0.0
    %1221 = vmatprep.subr.mxu0 0.0
    %1222 = vmatpush1.msra.mxu0 0.0
    %1223 = vmatprep.subr.mxu0 0.0
    %1224 = vmatpush1.msra.mxu0 0.0
    %1225 = vmatprep.subr.mxu0 0.0
    %1226 = vmatpush1.msra.mxu0 0.0
    %1227 = vmatprep.subr.mxu0 0.0
    %1228 = vmatpush1.msra.mxu0 0.0
    %1229 = vmatprep.subr.mxu0 0.0
    %1230 = vmatpush1.msra.mxu0 0.0
    %1231 = vmatprep.subr.mxu0 0.0
    %1232 = vmatpush1.msra.mxu0 0.0
    %1233 = vmatprep.subr.mxu0 0.0
    %1234 = vmatpush1.msra.mxu0 %v1054
    %1235 = vmatprep.subr.mxu0 0.0
    %1236 = vmatpush1.msra.mxu0 %v1053
    %1237 = vmatprep.subr.mxu0 0.0
    %1238 = vmatpush2.msra.mxu0 0.0
    %1239 = vmatprep.subr.mxu0 0.0
    %1240 = vmatpush2.msra.mxu0 0.0
    %1241 = vmatprep.subr.mxu0 0.0
    %1242 = vmatpush2.msra.mxu0 0.0
    %1243 = vmatprep.subr.mxu0 0.0
    %1244 = vmatpush2.msra.mxu0 0.0
    %1245 = vmatprep.subr.mxu0 0.0
    %1246 = vmatpush2.msra.mxu0 0.0
    %1247 = vmatprep.subr.mxu0 0.0
    %1248 = vmatpush2.msra.mxu0 0.0
    %1249 = vmatprep.subr.mxu0 0.0
    %1250 = vmatpush2.msra.mxu0 0.0
    %1251 = vmatprep.subr.mxu0 0.0
    %1252 = vmatpush2.msra.mxu0 0.0
    %1253 = vmatprep.subr.mxu0 0.0
    %1254 = vmatpush2.msra.mxu0 0.0
    %1255 = vmatprep.subr.mxu0 0.0
    %1256 = vmatpush2.msra.mxu0 0.0
    %1257 = vmatprep.subr.mxu0 0.0
    %1258 = vmatpush2.msra.mxu0 0.0
    %1259 = vmatprep.subr.mxu0 0.0
    %1260 = vmatpush2.msra.mxu0 0.0
    %1261 = vmatprep.subr.mxu0 0.0
    %1262 = vmatpush2.msra.mxu0 0.0
    %1263 = vmatprep.subr.mxu0 0.0
    %1264 = vmatpush2.msra.mxu0 0.0
    %1265 = vmatprep.subr.mxu0 0.0
    %1266 = vmatpush2.msra.mxu0 0.0
    %1267 = vmatprep.subr.mxu0 0.0
    %1268 = vmatpush2.msra.mxu0 0.0
    %1269 = vmatprep.mubr.f32.mxu0 0.0
    %1270 = vmatmul.mubr.f32.gmra.mxu0 %v188
    %v1271 = vpop.f32.mrf.mxu0
    %v1272 = vadd.f32 0.0, %v1271
    %v1273 = vpop.f32.mrf.mxu0
    %1274 = vmatprep.mubr.f32.mxu0 0.0
    %1275 = vmatmul.mubr.f32.gmra.mxu0 %v191
    %v1276 = vpop.f32.mrf.mxu0
    %v1277 = vadd.f32 0.0, %v1276
    %v1278 = vpop.f32.mrf.mxu0
    %1279 = vdwg.mxu0
    %1280 = vxpose.xlu0.b32.start [1/16] %v1049, 128
    %1281 = vxpose.xlu0.b32.cont [2/16] %v1050, 128
    %1282 = vxpose.xlu0.b32.cont [3/16] %v1051, 128
    %1283 = vxpose.xlu0.b32.cont [4/16] %v1052, 128
    %1284 = vxpose.xlu0.b32.cont [5/16] %v1053, 128
    %1285 = vxpose.xlu0.b32.cont [6/16] %v1054, 128
    %1286 = vxpose.xlu0.b32.cont [7/16] 0.0, 128
    %1287 = vxpose.xlu0.b32.cont [8/16] 0.0, 128
    %1288 = vxpose.xlu0.b32.cont [9/16] 0.0, 128
    %1289 = vxpose.xlu0.b32.cont [10/16] 0.0, 128
    %1290 = vxpose.xlu0.b32.cont [11/16] 0.0, 128
    %1291 = vxpose.xlu0.b32.cont [12/16] 0.0, 128
    %1292 = vxpose.xlu0.b32.cont [13/16] 0.0, 128
    %1293 = vxpose.xlu0.b32.cont [14/16] 0.0, 128
    %1294 = vxpose.xlu0.b32.cont [15/16] 0.0, 128
    %1295 = vxpose.xlu0.b32.end [16/16] 0.0, 128
    %v1296 = vpop.trf.xlu0
    %v1297 = vpop.trf.xlu0
    %v1298 = vpop.trf.xlu0
    %v1299 = vpop.trf.xlu0
    %v1300 = vpop.trf.xlu0
    %v1301 = vpop.trf.xlu0
    %v1302 = vpop.trf.xlu0
    %v1303 = vpop.trf.xlu0
    %v1304 = vpop.trf.xlu0
    %v1305 = vpop.trf.xlu0
    %v1306 = vpop.trf.xlu0
    %v1307 = vpop.trf.xlu0
    %v1308 = vpop.trf.xlu0
    %v1309 = vpop.trf.xlu0
    %v1310 = vpop.trf.xlu0
    %v1311 = vpop.trf.xlu0
    %v1313 = vsel %vm300, %v1296, 0
    %1315 = vmatprep.subr.mxu0 0.0
    %1316 = vmatpush1.msra.mxu0 0.0
    %1317 = vmatprep.subr.mxu0 0.0
    %1318 = vmatpush1.msra.mxu0 0.0
    %1319 = vmatprep.subr.mxu0 0.0
    %1320 = vmatpush1.msra.mxu0 0.0
    %1321 = vmatprep.subr.mxu0 0.0
    %1322 = vmatpush1.msra.mxu0 0.0
    %1323 = vmatprep.subr.mxu0 0.0
    %1324 = vmatpush1.msra.mxu0 0.0
    %1325 = vmatprep.subr.mxu0 0.0
    %1326 = vmatpush1.msra.mxu0 0.0
    %1327 = vmatprep.subr.mxu0 0.0
    %1328 = vmatpush1.msra.mxu0 0.0
    %1329 = vmatprep.subr.mxu0 0.0
    %1330 = vmatpush1.msra.mxu0 0.0
    %1331 = vmatprep.subr.mxu0 0.0
    %1332 = vmatpush1.msra.mxu0 0.0
    %1333 = vmatprep.subr.mxu0 0.0
    %1334 = vmatpush1.msra.mxu0 0.0
    %1335 = vmatprep.subr.mxu0 0.0
    %1336 = vmatpush1.msra.mxu0 %v1277
    %1337 = vmatprep.subr.mxu0 0.0
    %1338 = vmatpush1.msra.mxu0 %v1272
    %1339 = vmatprep.subr.mxu0 0.0
    %1340 = vmatpush1.msra.mxu0 %v1202
    %1341 = vmatprep.subr.mxu0 0.0
    %1342 = vmatpush1.msra.mxu0 %v1197
    %1343 = vmatprep.subr.mxu0 0.0
    %1344 = vmatpush1.msra.mxu0 %v1127
    %1345 = vmatprep.subr.mxu0 0.0
    %1346 = vmatpush1.msra.mxu0 %v1122
    %1347 = vmatprep.subr.mxu0 0.0
    %1348 = vmatpush2.msra.mxu0 0.0
    %1349 = vmatprep.subr.mxu0 0.0
    %1350 = vmatpush2.msra.mxu0 0.0
    %1351 = vmatprep.subr.mxu0 0.0
    %1352 = vmatpush2.msra.mxu0 0.0
    %1353 = vmatprep.subr.mxu0 0.0
    %1354 = vmatpush2.msra.mxu0 0.0
    %1355 = vmatprep.subr.mxu0 0.0
    %1356 = vmatpush2.msra.mxu0 0.0
    %1357 = vmatprep.subr.mxu0 0.0
    %1358 = vmatpush2.msra.mxu0 0.0
    %1359 = vmatprep.subr.mxu0 0.0
    %1360 = vmatpush2.msra.mxu0 0.0
    %1361 = vmatprep.subr.mxu0 0.0
    %1362 = vmatpush2.msra.mxu0 0.0
    %1363 = vmatprep.subr.mxu0 0.0
    %1364 = vmatpush2.msra.mxu0 0.0
    %1365 = vmatprep.subr.mxu0 0.0
    %1366 = vmatpush2.msra.mxu0 0.0
    %1367 = vmatprep.subr.mxu0 0.0
    %1368 = vmatpush2.msra.mxu0 0.0
    %1369 = vmatprep.subr.mxu0 0.0
    %1370 = vmatpush2.msra.mxu0 0.0
    %1371 = vmatprep.subr.mxu0 0.0
    %1372 = vmatpush2.msra.mxu0 0.0
    %1373 = vmatprep.subr.mxu0 0.0
    %1374 = vmatpush2.msra.mxu0 0.0
    %1375 = vmatprep.subr.mxu0 0.0
    %1376 = vmatpush2.msra.mxu0 0.0
    %1377 = vmatprep.subr.mxu0 0.0
    %1378 = vmatpush2.msra.mxu0 0.0
    %1379 = vmatprep.mubr.f32.mxu0 0.0
    %1380 = vmatmul.mubr.f32.gmra.mxu0 %v1313
    %v1381 = vpop.f32.mrf.mxu0
    %v1382 = vadd.f32 0.0, %v1381
    %v1383 = vpop.f32.mrf.mxu0
    %1384 = vdwg.mxu0
    %1386 = vrot.lane.b32.xlu0 %v708, 8
    %v1387 = vpop.permute.xlu0 %1386
    %1390 = vrot.lane.b32.xlu0 %v1045, 16
    %v1391 = vpop.permute.xlu0 %1390
    %1394 = vrot.lane.b32.xlu0 %v1382, 24
    %v1395 = vpop.permute.xlu0 %1394
    %vm1397 = vcmask 64512
    %v1398 = vsel %vm1397, %v371, %v1387
    %v1399 = vsel %vm24, %v1398, %v1391
    %vm1400 = vcmask 195584
    %v1401 = vsel %vm1400, %v1399, %v1395
    %s1402 = scalar_lea.vmem %s0, 48
    %v1403 = vld [vmem:[%s1402] sm:$0xff]
    %v1404 = vld [vmem:[%s1402 + $0x8] sm:$0xff]
    %v1405 = vld [vmem:[%s1402 + $0x10] sm:$0xff]
    %v1406 = vld [vmem:[%s1402 + $0x18] sm:$0xff]
    %v1407 = vld [vmem:[%s1402 + $0x20] sm:$0xff]
    %v1408 = vld [vmem:[%s1402 + $0x28] sm:$0xff]
    %v1410 = vsel %vm24, %v1403, 0
    %v1413 = vsel %vm24, %v1404, 0
    %1415 = vmatprep.subr.mxu0 0.0
    %1416 = vmatpush1.msra.mxu0 0.0
    %1417 = vmatprep.subr.mxu0 0.0
    %1418 = vmatpush1.msra.mxu0 0.0
    %1419 = vmatprep.subr.mxu0 0.0
    %1420 = vmatpush1.msra.mxu0 0.0
    %1421 = vmatprep.subr.mxu0 0.0
    %1422 = vmatpush1.msra.mxu0 0.0
    %1423 = vmatprep.subr.mxu0 0.0
    %1424 = vmatpush1.msra.mxu0 0.0
    %1425 = vmatprep.subr.mxu0 0.0
    %1426 = vmatpush1.msra.mxu0 0.0
    %1427 = vmatprep.subr.mxu0 0.0
    %1428 = vmatpush1.msra.mxu0 0.0
    %1429 = vmatprep.subr.mxu0 0.0
    %1430 = vmatpush1.msra.mxu0 0.0
    %1431 = vmatprep.subr.mxu0 0.0
    %1432 = vmatpush1.msra.mxu0 0.0
    %1433 = vmatprep.subr.mxu0 0.0
    %1434 = vmatpush1.msra.mxu0 0.0
    %1435 = vmatprep.subr.mxu0 0.0
    %1436 = vmatpush1.msra.mxu0 0.0
    %1437 = vmatprep.subr.mxu0 0.0
    %1438 = vmatpush1.msra.mxu0 0.0
    %1439 = vmatprep.subr.mxu0 0.0
    %1440 = vmatpush1.msra.mxu0 0.0
    %1441 = vmatprep.subr.mxu0 0.0
    %1442 = vmatpush1.msra.mxu0 0.0
    %1443 = vmatprep.subr.mxu0 0.0
    %1444 = vmatpush1.msra.mxu0 %v19
    %1445 = vmatprep.subr.mxu0 0.0
    %1446 = vmatpush1.msra.mxu0 %v18
    %1447 = vmatprep.subr.mxu0 0.0
    %1448 = vmatpush2.msra.mxu0 0.0
    %1449 = vmatprep.subr.mxu0 0.0
    %1450 = vmatpush2.msra.mxu0 0.0
    %1451 = vmatprep.subr.mxu0 0.0
    %1452 = vmatpush2.msra.mxu0 0.0
    %1453 = vmatprep.subr.mxu0 0.0
    %1454 = vmatpush2.msra.mxu0 0.0
    %1455 = vmatprep.subr.mxu0 0.0
    %1456 = vmatpush2.msra.mxu0 0.0
    %1457 = vmatprep.subr.mxu0 0.0
    %1458 = vmatpush2.msra.mxu0 0.0
    %1459 = vmatprep.subr.mxu0 0.0
    %1460 = vmatpush2.msra.mxu0 0.0
    %1461 = vmatprep.subr.mxu0 0.0
    %1462 = vmatpush2.msra.mxu0 0.0
    %1463 = vmatprep.subr.mxu0 0.0
    %1464 = vmatpush2.msra.mxu0 0.0
    %1465 = vmatprep.subr.mxu0 0.0
    %1466 = vmatpush2.msra.mxu0 0.0
    %1467 = vmatprep.subr.mxu0 0.0
    %1468 = vmatpush2.msra.mxu0 0.0
    %1469 = vmatprep.subr.mxu0 0.0
    %1470 = vmatpush2.msra.mxu0 0.0
    %1471 = vmatprep.subr.mxu0 0.0
    %1472 = vmatpush2.msra.mxu0 0.0
    %1473 = vmatprep.subr.mxu0 0.0
    %1474 = vmatpush2.msra.mxu0 0.0
    %1475 = vmatprep.subr.mxu0 0.0
    %1476 = vmatpush2.msra.mxu0 0.0
    %1477 = vmatprep.subr.mxu0 0.0
    %1478 = vmatpush2.msra.mxu0 0.0
    %1479 = vmatprep.mubr.f32.mxu0 0.0
    %1480 = vmatmul.mubr.f32.gmra.mxu0 %v1410
    %v1481 = vpop.f32.mrf.mxu0
    %v1482 = vadd.f32 0.0, %v1481
    %v1483 = vpop.f32.mrf.mxu0
    %1484 = vmatprep.mubr.f32.mxu0 0.0
    %1485 = vmatmul.mubr.f32.gmra.mxu0 %v1413
    %v1486 = vpop.f32.mrf.mxu0
    %v1487 = vadd.f32 0.0, %v1486
    %v1488 = vpop.f32.mrf.mxu0
    %1489 = vdwg.mxu0
    %v1491 = vsel %vm24, %v1405, 0
    %v1494 = vsel %vm24, %v1406, 0
    %1496 = vmatprep.subr.mxu0 0.0
    %1497 = vmatpush1.msra.mxu0 0.0
    %1498 = vmatprep.subr.mxu0 0.0
    %1499 = vmatpush1.msra.mxu0 0.0
    %1500 = vmatprep.subr.mxu0 0.0
    %1501 = vmatpush1.msra.mxu0 0.0
    %1502 = vmatprep.subr.mxu0 0.0
    %1503 = vmatpush1.msra.mxu0 0.0
    %1504 = vmatprep.subr.mxu0 0.0
    %1505 = vmatpush1.msra.mxu0 0.0
    %1506 = vmatprep.subr.mxu0 0.0
    %1507 = vmatpush1.msra.mxu0 0.0
    %1508 = vmatprep.subr.mxu0 0.0
    %1509 = vmatpush1.msra.mxu0 0.0
    %1510 = vmatprep.subr.mxu0 0.0
    %1511 = vmatpush1.msra.mxu0 0.0
    %1512 = vmatprep.subr.mxu0 0.0
    %1513 = vmatpush1.msra.mxu0 0.0
    %1514 = vmatprep.subr.mxu0 0.0
    %1515 = vmatpush1.msra.mxu0 0.0
    %1516 = vmatprep.subr.mxu0 0.0
    %1517 = vmatpush1.msra.mxu0 0.0
    %1518 = vmatprep.subr.mxu0 0.0
    %1519 = vmatpush1.msra.mxu0 0.0
    %1520 = vmatprep.subr.mxu0 0.0
    %1521 = vmatpush1.msra.mxu0 0.0
    %1522 = vmatprep.subr.mxu0 0.0
    %1523 = vmatpush1.msra.mxu0 0.0
    %1524 = vmatprep.subr.mxu0 0.0
    %1525 = vmatpush1.msra.mxu0 %v21
    %1526 = vmatprep.subr.mxu0 0.0
    %1527 = vmatpush1.msra.mxu0 %v20
    %1528 = vmatprep.subr.mxu0 0.0
    %1529 = vmatpush2.msra.mxu0 0.0
    %1530 = vmatprep.subr.mxu0 0.0
    %1531 = vmatpush2.msra.mxu0 0.0
    %1532 = vmatprep.subr.mxu0 0.0
    %1533 = vmatpush2.msra.mxu0 0.0
    %1534 = vmatprep.subr.mxu0 0.0
    %1535 = vmatpush2.msra.mxu0 0.0
    %1536 = vmatprep.subr.mxu0 0.0
    %1537 = vmatpush2.msra.mxu0 0.0
    %1538 = vmatprep.subr.mxu0 0.0
    %1539 = vmatpush2.msra.mxu0 0.0
    %1540 = vmatprep.subr.mxu0 0.0
    %1541 = vmatpush2.msra.mxu0 0.0
    %1542 = vmatprep.subr.mxu0 0.0
    %1543 = vmatpush2.msra.mxu0 0.0
    %1544 = vmatprep.subr.mxu0 0.0
    %1545 = vmatpush2.msra.mxu0 0.0
    %1546 = vmatprep.subr.mxu0 0.0
    %1547 = vmatpush2.msra.mxu0 0.0
    %1548 = vmatprep.subr.mxu0 0.0
    %1549 = vmatpush2.msra.mxu0 0.0
    %1550 = vmatprep.subr.mxu0 0.0
    %1551 = vmatpush2.msra.mxu0 0.0
    %1552 = vmatprep.subr.mxu0 0.0
    %1553 = vmatpush2.msra.mxu0 0.0
    %1554 = vmatprep.subr.mxu0 0.0
    %1555 = vmatpush2.msra.mxu0 0.0
    %1556 = vmatprep.subr.mxu0 0.0
    %1557 = vmatpush2.msra.mxu0 0.0
    %1558 = vmatprep.subr.mxu0 0.0
    %1559 = vmatpush2.msra.mxu0 0.0
    %1560 = vmatprep.mubr.f32.mxu0 0.0
    %1561 = vmatmul.mubr.f32.gmra.mxu0 %v1491
    %v1562 = vpop.f32.mrf.mxu0
    %v1563 = vadd.f32 0.0, %v1562
    %v1564 = vpop.f32.mrf.mxu0
    %1565 = vmatprep.mubr.f32.mxu0 0.0
    %1566 = vmatmul.mubr.f32.gmra.mxu0 %v1494
    %v1567 = vpop.f32.mrf.mxu0
    %v1568 = vadd.f32 0.0, %v1567
    %v1569 = vpop.f32.mrf.mxu0
    %1570 = vdwg.mxu0
    %v1572 = vsel %vm24, %v1407, 0
    %v1575 = vsel %vm24, %v1408, 0
    %1577 = vmatprep.subr.mxu0 0.0
    %1578 = vmatpush1.msra.mxu0 0.0
    %1579 = vmatprep.subr.mxu0 0.0
    %1580 = vmatpush1.msra.mxu0 0.0
    %1581 = vmatprep.subr.mxu0 0.0
    %1582 = vmatpush1.msra.mxu0 0.0
    %1583 = vmatprep.subr.mxu0 0.0
    %1584 = vmatpush1.msra.mxu0 0.0
    %1585 = vmatprep.subr.mxu0 0.0
    %1586 = vmatpush1.msra.mxu0 0.0
    %1587 = vmatprep.subr.mxu0 0.0
    %1588 = vmatpush1.msra.mxu0 0.0
    %1589 = vmatprep.subr.mxu0 0.0
    %1590 = vmatpush1.msra.mxu0 0.0
    %1591 = vmatprep.subr.mxu0 0.0
    %1592 = vmatpush1.msra.mxu0 0.0
    %1593 = vmatprep.subr.mxu0 0.0
    %1594 = vmatpush1.msra.mxu0 0.0
    %1595 = vmatprep.subr.mxu0 0.0
    %1596 = vmatpush1.msra.mxu0 0.0
    %1597 = vmatprep.subr.mxu0 0.0
    %1598 = vmatpush1.msra.mxu0 0.0
    %1599 = vmatprep.subr.mxu0 0.0
    %1600 = vmatpush1.msra.mxu0 0.0
    %1601 = vmatprep.subr.mxu0 0.0
    %1602 = vmatpush1.msra.mxu0 0.0
    %1603 = vmatprep.subr.mxu0 0.0
    %1604 = vmatpush1.msra.mxu0 0.0
    %1605 = vmatprep.subr.mxu0 0.0
    %1606 = vmatpush1.msra.mxu0 %v23
    %1607 = vmatprep.subr.mxu0 0.0
    %1608 = vmatpush1.msra.mxu0 %v22
    %1609 = vmatprep.subr.mxu0 0.0
    %1610 = vmatpush2.msra.mxu0 0.0
    %1611 = vmatprep.subr.mxu0 0.0
    %1612 = vmatpush2.msra.mxu0 0.0
    %1613 = vmatprep.subr.mxu0 0.0
    %1614 = vmatpush2.msra.mxu0 0.0
    %1615 = vmatprep.subr.mxu0 0.0
    %1616 = vmatpush2.msra.mxu0 0.0
    %1617 = vmatprep.subr.mxu0 0.0
    %1618 = vmatpush2.msra.mxu0 0.0
    %1619 = vmatprep.subr.mxu0 0.0
    %1620 = vmatpush2.msra.mxu0 0.0
    %1621 = vmatprep.subr.mxu0 0.0
    %1622 = vmatpush2.msra.mxu0 0.0
    %1623 = vmatprep.subr.mxu0 0.0
    %1624 = vmatpush2.msra.mxu0 0.0
    %1625 = vmatprep.subr.mxu0 0.0
    %1626 = vmatpush2.msra.mxu0 0.0
    %1627 = vmatprep.subr.mxu0 0.0
    %1628 = vmatpush2.msra.mxu0 0.0
    %1629 = vmatprep.subr.mxu0 0.0
    %1630 = vmatpush2.msra.mxu0 0.0
    %1631 = vmatprep.subr.mxu0 0.0
    %1632 = vmatpush2.msra.mxu0 0.0
    %1633 = vmatprep.subr.mxu0 0.0
    %1634 = vmatpush2.msra.mxu0 0.0
    %1635 = vmatprep.subr.mxu0 0.0
    %1636 = vmatpush2.msra.mxu0 0.0
    %1637 = vmatprep.subr.mxu0 0.0
    %1638 = vmatpush2.msra.mxu0 0.0
    %1639 = vmatprep.subr.mxu0 0.0
    %1640 = vmatpush2.msra.mxu0 0.0
    %1641 = vmatprep.mubr.f32.mxu0 0.0
    %1642 = vmatmul.mubr.f32.gmra.mxu0 %v1572
    %v1643 = vpop.f32.mrf.mxu0
    %v1644 = vadd.f32 0.0, %v1643
    %v1645 = vpop.f32.mrf.mxu0
    %1646 = vmatprep.mubr.f32.mxu0 0.0
    %1647 = vmatmul.mubr.f32.gmra.mxu0 %v1575
    %v1648 = vpop.f32.mrf.mxu0
    %v1649 = vadd.f32 0.0, %v1648
    %v1650 = vpop.f32.mrf.mxu0
    %1651 = vdwg.mxu0
    %1652 = vmatprep.subr.mxu0 0.0
    %1653 = vmatpush1.msra.mxu0 0.0
    %1654 = vmatprep.subr.mxu0 0.0
    %1655 = vmatpush1.msra.mxu0 0.0
    %1656 = vmatprep.subr.mxu0 0.0
    %1657 = vmatpush1.msra.mxu0 0.0
    %1658 = vmatprep.subr.mxu0 0.0
    %1659 = vmatpush1.msra.mxu0 0.0
    %1660 = vmatprep.subr.mxu0 0.0
    %1661 = vmatpush1.msra.mxu0 0.0
    %1662 = vmatprep.subr.mxu0 0.0
    %1663 = vmatpush1.msra.mxu0 0.0
    %1664 = vmatprep.subr.mxu0 0.0
    %1665 = vmatpush1.msra.mxu0 0.0
    %1666 = vmatprep.subr.mxu0 0.0
    %1667 = vmatpush1.msra.mxu0 0.0
    %1668 = vmatprep.subr.mxu0 0.0
    %1669 = vmatpush1.msra.mxu0 0.0
    %1670 = vmatprep.subr.mxu0 0.0
    %1671 = vmatpush1.msra.mxu0 0.0
    %1672 = vmatprep.subr.mxu0 0.0
    %1673 = vmatpush1.msra.mxu0 %v1649
    %1674 = vmatprep.subr.mxu0 0.0
    %1675 = vmatpush1.msra.mxu0 %v1644
    %1676 = vmatprep.subr.mxu0 0.0
    %1677 = vmatpush1.msra.mxu0 %v1568
    %1678 = vmatprep.subr.mxu0 0.0
    %1679 = vmatpush1.msra.mxu0 %v1563
    %1680 = vmatprep.subr.mxu0 0.0
    %1681 = vmatpush1.msra.mxu0 %v1487
    %1682 = vmatprep.subr.mxu0 0.0
    %1683 = vmatpush1.msra.mxu0 %v1482
    %1684 = vmatprep.subr.mxu0 0.0
    %1685 = vmatpush2.msra.mxu0 0.0
    %1686 = vmatprep.subr.mxu0 0.0
    %1687 = vmatpush2.msra.mxu0 0.0
    %1688 = vmatprep.subr.mxu0 0.0
    %1689 = vmatpush2.msra.mxu0 0.0
    %1690 = vmatprep.subr.mxu0 0.0
    %1691 = vmatpush2.msra.mxu0 0.0
    %1692 = vmatprep.subr.mxu0 0.0
    %1693 = vmatpush2.msra.mxu0 0.0
    %1694 = vmatprep.subr.mxu0 0.0
    %1695 = vmatpush2.msra.mxu0 0.0
    %1696 = vmatprep.subr.mxu0 0.0
    %1697 = vmatpush2.msra.mxu0 0.0
    %1698 = vmatprep.subr.mxu0 0.0
    %1699 = vmatpush2.msra.mxu0 0.0
    %1700 = vmatprep.subr.mxu0 0.0
    %1701 = vmatpush2.msra.mxu0 0.0
    %1702 = vmatprep.subr.mxu0 0.0
    %1703 = vmatpush2.msra.mxu0 0.0
    %1704 = vmatprep.subr.mxu0 0.0
    %1705 = vmatpush2.msra.mxu0 0.0
    %1706 = vmatprep.subr.mxu0 0.0
    %1707 = vmatpush2.msra.mxu0 0.0
    %1708 = vmatprep.subr.mxu0 0.0
    %1709 = vmatpush2.msra.mxu0 0.0
    %1710 = vmatprep.subr.mxu0 0.0
    %1711 = vmatpush2.msra.mxu0 0.0
    %1712 = vmatprep.subr.mxu0 0.0
    %1713 = vmatpush2.msra.mxu0 0.0
    %1714 = vmatprep.subr.mxu0 0.0
    %1715 = vmatpush2.msra.mxu0 0.0
    %1716 = vmatprep.mubr.f32.mxu0 0.0
    %1717 = vmatmul.mubr.f32.gmra.mxu0 %v302
    %v1718 = vpop.f32.mrf.mxu0
    %v1719 = vadd.f32 0.0, %v1718
    %v1720 = vpop.f32.mrf.mxu0
    %1721 = vdwg.mxu0
    %1722 = vmatprep.subr.mxu0 0.0
    %1723 = vmatpush1.msra.mxu0 0.0
    %1724 = vmatprep.subr.mxu0 0.0
    %1725 = vmatpush1.msra.mxu0 0.0
    %1726 = vmatprep.subr.mxu0 0.0
    %1727 = vmatpush1.msra.mxu0 0.0
    %1728 = vmatprep.subr.mxu0 0.0
    %1729 = vmatpush1.msra.mxu0 0.0
    %1730 = vmatprep.subr.mxu0 0.0
    %1731 = vmatpush1.msra.mxu0 0.0
    %1732 = vmatprep.subr.mxu0 0.0
    %1733 = vmatpush1.msra.mxu0 0.0
    %1734 = vmatprep.subr.mxu0 0.0
    %1735 = vmatpush1.msra.mxu0 0.0
    %1736 = vmatprep.subr.mxu0 0.0
    %1737 = vmatpush1.msra.mxu0 0.0
    %1738 = vmatprep.subr.mxu0 0.0
    %1739 = vmatpush1.msra.mxu0 0.0
    %1740 = vmatprep.subr.mxu0 0.0
    %1741 = vmatpush1.msra.mxu0 0.0
    %1742 = vmatprep.subr.mxu0 0.0
    %1743 = vmatpush1.msra.mxu0 0.0
    %1744 = vmatprep.subr.mxu0 0.0
    %1745 = vmatpush1.msra.mxu0 0.0
    %1746 = vmatprep.subr.mxu0 0.0
    %1747 = vmatpush1.msra.mxu0 0.0
    %1748 = vmatprep.subr.mxu0 0.0
    %1749 = vmatpush1.msra.mxu0 0.0
    %1750 = vmatprep.subr.mxu0 0.0
    %1751 = vmatpush1.msra.mxu0 %v376
    %1752 = vmatprep.subr.mxu0 0.0
    %1753 = vmatpush1.msra.mxu0 %v375
    %1754 = vmatprep.subr.mxu0 0.0
    %1755 = vmatpush2.msra.mxu0 0.0
    %1756 = vmatprep.subr.mxu0 0.0
    %1757 = vmatpush2.msra.mxu0 0.0
    %1758 = vmatprep.subr.mxu0 0.0
    %1759 = vmatpush2.msra.mxu0 0.0
    %1760 = vmatprep.subr.mxu0 0.0
    %1761 = vmatpush2.msra.mxu0 0.0
    %1762 = vmatprep.subr.mxu0 0.0
    %1763 = vmatpush2.msra.mxu0 0.0
    %1764 = vmatprep.subr.mxu0 0.0
    %1765 = vmatpush2.msra.mxu0 0.0
    %1766 = vmatprep.subr.mxu0 0.0
    %1767 = vmatpush2.msra.mxu0 0.0
    %1768 = vmatprep.subr.mxu0 0.0
    %1769 = vmatpush2.msra.mxu0 0.0
    %1770 = vmatprep.subr.mxu0 0.0
    %1771 = vmatpush2.msra.mxu0 0.0
    %1772 = vmatprep.subr.mxu0 0.0
    %1773 = vmatpush2.msra.mxu0 0.0
    %1774 = vmatprep.subr.mxu0 0.0
    %1775 = vmatpush2.msra.mxu0 0.0
    %1776 = vmatprep.subr.mxu0 0.0
    %1777 = vmatpush2.msra.mxu0 0.0
    %1778 = vmatprep.subr.mxu0 0.0
    %1779 = vmatpush2.msra.mxu0 0.0
    %1780 = vmatprep.subr.mxu0 0.0
    %1781 = vmatpush2.msra.mxu0 0.0
    %1782 = vmatprep.subr.mxu0 0.0
    %1783 = vmatpush2.msra.mxu0 0.0
    %1784 = vmatprep.subr.mxu0 0.0
    %1785 = vmatpush2.msra.mxu0 0.0
    %1786 = vmatprep.mubr.f32.mxu0 0.0
    %1787 = vmatmul.mubr.f32.gmra.mxu0 %v1410
    %v1788 = vpop.f32.mrf.mxu0
    %v1789 = vadd.f32 0.0, %v1788
    %v1790 = vpop.f32.mrf.mxu0
    %1791 = vmatprep.mubr.f32.mxu0 0.0
    %1792 = vmatmul.mubr.f32.gmra.mxu0 %v1413
    %v1793 = vpop.f32.mrf.mxu0
    %v1794 = vadd.f32 0.0, %v1793
    %v1795 = vpop.f32.mrf.mxu0
    %1796 = vdwg.mxu0
    %1797 = vmatprep.subr.mxu0 0.0
    %1798 = vmatpush1.msra.mxu0 0.0
    %1799 = vmatprep.subr.mxu0 0.0
    %1800 = vmatpush1.msra.mxu0 0.0
    %1801 = vmatprep.subr.mxu0 0.0
    %1802 = vmatpush1.msra.mxu0 0.0
    %1803 = vmatprep.subr.mxu0 0.0
    %1804 = vmatpush1.msra.mxu0 0.0
    %1805 = vmatprep.subr.mxu0 0.0
    %1806 = vmatpush1.msra.mxu0 0.0
    %1807 = vmatprep.subr.mxu0 0.0
    %1808 = vmatpush1.msra.mxu0 0.0
    %1809 = vmatprep.subr.mxu0 0.0
    %1810 = vmatpush1.msra.mxu0 0.0
    %1811 = vmatprep.subr.mxu0 0.0
    %1812 = vmatpush1.msra.mxu0 0.0
    %1813 = vmatprep.subr.mxu0 0.0
    %1814 = vmatpush1.msra.mxu0 0.0
    %1815 = vmatprep.subr.mxu0 0.0
    %1816 = vmatpush1.msra.mxu0 0.0
    %1817 = vmatprep.subr.mxu0 0.0
    %1818 = vmatpush1.msra.mxu0 0.0
    %1819 = vmatprep.subr.mxu0 0.0
    %1820 = vmatpush1.msra.mxu0 0.0
    %1821 = vmatprep.subr.mxu0 0.0
    %1822 = vmatpush1.msra.mxu0 0.0
    %1823 = vmatprep.subr.mxu0 0.0
    %1824 = vmatpush1.msra.mxu0 0.0
    %1825 = vmatprep.subr.mxu0 0.0
    %1826 = vmatpush1.msra.mxu0 %v378
    %1827 = vmatprep.subr.mxu0 0.0
    %1828 = vmatpush1.msra.mxu0 %v377
    %1829 = vmatprep.subr.mxu0 0.0
    %1830 = vmatpush2.msra.mxu0 0.0
    %1831 = vmatprep.subr.mxu0 0.0
    %1832 = vmatpush2.msra.mxu0 0.0
    %1833 = vmatprep.subr.mxu0 0.0
    %1834 = vmatpush2.msra.mxu0 0.0
    %1835 = vmatprep.subr.mxu0 0.0
    %1836 = vmatpush2.msra.mxu0 0.0
    %1837 = vmatprep.subr.mxu0 0.0
    %1838 = vmatpush2.msra.mxu0 0.0
    %1839 = vmatprep.subr.mxu0 0.0
    %1840 = vmatpush2.msra.mxu0 0.0
    %1841 = vmatprep.subr.mxu0 0.0
    %1842 = vmatpush2.msra.mxu0 0.0
    %1843 = vmatprep.subr.mxu0 0.0
    %1844 = vmatpush2.msra.mxu0 0.0
    %1845 = vmatprep.subr.mxu0 0.0
    %1846 = vmatpush2.msra.mxu0 0.0
    %1847 = vmatprep.subr.mxu0 0.0
    %1848 = vmatpush2.msra.mxu0 0.0
    %1849 = vmatprep.subr.mxu0 0.0
    %1850 = vmatpush2.msra.mxu0 0.0
    %1851 = vmatprep.subr.mxu0 0.0
    %1852 = vmatpush2.msra.mxu0 0.0
    %1853 = vmatprep.subr.mxu0 0.0
    %1854 = vmatpush2.msra.mxu0 0.0
    %1855 = vmatprep.subr.mxu0 0.0
    %1856 = vmatpush2.msra.mxu0 0.0
    %1857 = vmatprep.subr.mxu0 0.0
    %1858 = vmatpush2.msra.mxu0 0.0
    %1859 = vmatprep.subr.mxu0 0.0
    %1860 = vmatpush2.msra.mxu0 0.0
    %1861 = vmatprep.mubr.f32.mxu0 0.0
    %1862 = vmatmul.mubr.f32.gmra.mxu0 %v1491
    %v1863 = vpop.f32.mrf.mxu0
    %v1864 = vadd.f32 0.0, %v1863
    %v1865 = vpop.f32.mrf.mxu0
    %1866 = vmatprep.mubr.f32.mxu0 0.0
    %1867 = vmatmul.mubr.f32.gmra.mxu0 %v1494
    %v1868 = vpop.f32.mrf.mxu0
    %v1869 = vadd.f32 0.0, %v1868
    %v1870 = vpop.f32.mrf.mxu0
    %1871 = vdwg.mxu0
    %1872 = vmatprep.subr.mxu0 0.0
    %1873 = vmatpush1.msra.mxu0 0.0
    %1874 = vmatprep.subr.mxu0 0.0
    %1875 = vmatpush1.msra.mxu0 0.0
    %1876 = vmatprep.subr.mxu0 0.0
    %1877 = vmatpush1.msra.mxu0 0.0
    %1878 = vmatprep.subr.mxu0 0.0
    %1879 = vmatpush1.msra.mxu0 0.0
    %1880 = vmatprep.subr.mxu0 0.0
    %1881 = vmatpush1.msra.mxu0 0.0
    %1882 = vmatprep.subr.mxu0 0.0
    %1883 = vmatpush1.msra.mxu0 0.0
    %1884 = vmatprep.subr.mxu0 0.0
    %1885 = vmatpush1.msra.mxu0 0.0
    %1886 = vmatprep.subr.mxu0 0.0
    %1887 = vmatpush1.msra.mxu0 0.0
    %1888 = vmatprep.subr.mxu0 0.0
    %1889 = vmatpush1.msra.mxu0 0.0
    %1890 = vmatprep.subr.mxu0 0.0
    %1891 = vmatpush1.msra.mxu0 0.0
    %1892 = vmatprep.subr.mxu0 0.0
    %1893 = vmatpush1.msra.mxu0 0.0
    %1894 = vmatprep.subr.mxu0 0.0
    %1895 = vmatpush1.msra.mxu0 0.0
    %1896 = vmatprep.subr.mxu0 0.0
    %1897 = vmatpush1.msra.mxu0 0.0
    %1898 = vmatprep.subr.mxu0 0.0
    %1899 = vmatpush1.msra.mxu0 0.0
    %1900 = vmatprep.subr.mxu0 0.0
    %1901 = vmatpush1.msra.mxu0 %v380
    %1902 = vmatprep.subr.mxu0 0.0
    %1903 = vmatpush1.msra.mxu0 %v379
    %1904 = vmatprep.subr.mxu0 0.0
    %1905 = vmatpush2.msra.mxu0 0.0
    %1906 = vmatprep.subr.mxu0 0.0
    %1907 = vmatpush2.msra.mxu0 0.0
    %1908 = vmatprep.subr.mxu0 0.0
    %1909 = vmatpush2.msra.mxu0 0.0
    %1910 = vmatprep.subr.mxu0 0.0
    %1911 = vmatpush2.msra.mxu0 0.0
    %1912 = vmatprep.subr.mxu0 0.0
    %1913 = vmatpush2.msra.mxu0 0.0
    %1914 = vmatprep.subr.mxu0 0.0
    %1915 = vmatpush2.msra.mxu0 0.0
    %1916 = vmatprep.subr.mxu0 0.0
    %1917 = vmatpush2.msra.mxu0 0.0
    %1918 = vmatprep.subr.mxu0 0.0
    %1919 = vmatpush2.msra.mxu0 0.0
    %1920 = vmatprep.subr.mxu0 0.0
    %1921 = vmatpush2.msra.mxu0 0.0
    %1922 = vmatprep.subr.mxu0 0.0
    %1923 = vmatpush2.msra.mxu0 0.0
    %1924 = vmatprep.subr.mxu0 0.0
    %1925 = vmatpush2.msra.mxu0 0.0
    %1926 = vmatprep.subr.mxu0 0.0
    %1927 = vmatpush2.msra.mxu0 0.0
    %1928 = vmatprep.subr.mxu0 0.0
    %1929 = vmatpush2.msra.mxu0 0.0
    %1930 = vmatprep.subr.mxu0 0.0
    %1931 = vmatpush2.msra.mxu0 0.0
    %1932 = vmatprep.subr.mxu0 0.0
    %1933 = vmatpush2.msra.mxu0 0.0
    %1934 = vmatprep.subr.mxu0 0.0
    %1935 = vmatpush2.msra.mxu0 0.0
    %1936 = vmatprep.mubr.f32.mxu0 0.0
    %1937 = vmatmul.mubr.f32.gmra.mxu0 %v1572
    %v1938 = vpop.f32.mrf.mxu0
    %v1939 = vadd.f32 0.0, %v1938
    %v1940 = vpop.f32.mrf.mxu0
    %1941 = vmatprep.mubr.f32.mxu0 0.0
    %1942 = vmatmul.mubr.f32.gmra.mxu0 %v1575
    %v1943 = vpop.f32.mrf.mxu0
    %v1944 = vadd.f32 0.0, %v1943
    %v1945 = vpop.f32.mrf.mxu0
    %1946 = vdwg.mxu0
    %1947 = vmatprep.subr.mxu0 0.0
    %1948 = vmatpush1.msra.mxu0 0.0
    %1949 = vmatprep.subr.mxu0 0.0
    %1950 = vmatpush1.msra.mxu0 0.0
    %1951 = vmatprep.subr.mxu0 0.0
    %1952 = vmatpush1.msra.mxu0 0.0
    %1953 = vmatprep.subr.mxu0 0.0
    %1954 = vmatpush1.msra.mxu0 0.0
    %1955 = vmatprep.subr.mxu0 0.0
    %1956 = vmatpush1.msra.mxu0 0.0
    %1957 = vmatprep.subr.mxu0 0.0
    %1958 = vmatpush1.msra.mxu0 0.0
    %1959 = vmatprep.subr.mxu0 0.0
    %1960 = vmatpush1.msra.mxu0 0.0
    %1961 = vmatprep.subr.mxu0 0.0
    %1962 = vmatpush1.msra.mxu0 0.0
    %1963 = vmatprep.subr.mxu0 0.0
    %1964 = vmatpush1.msra.mxu0 0.0
    %1965 = vmatprep.subr.mxu0 0.0
    %1966 = vmatpush1.msra.mxu0 0.0
    %1967 = vmatprep.subr.mxu0 0.0
    %1968 = vmatpush1.msra.mxu0 %v1944
    %1969 = vmatprep.subr.mxu0 0.0
    %1970 = vmatpush1.msra.mxu0 %v1939
    %1971 = vmatprep.subr.mxu0 0.0
    %1972 = vmatpush1.msra.mxu0 %v1869
    %1973 = vmatprep.subr.mxu0 0.0
    %1974 = vmatpush1.msra.mxu0 %v1864
    %1975 = vmatprep.subr.mxu0 0.0
    %1976 = vmatpush1.msra.mxu0 %v1794
    %1977 = vmatprep.subr.mxu0 0.0
    %1978 = vmatpush1.msra.mxu0 %v1789
    %1979 = vmatprep.subr.mxu0 0.0
    %1980 = vmatpush2.msra.mxu0 0.0
    %1981 = vmatprep.subr.mxu0 0.0
    %1982 = vmatpush2.msra.mxu0 0.0
    %1983 = vmatprep.subr.mxu0 0.0
    %1984 = vmatpush2.msra.mxu0 0.0
    %1985 = vmatprep.subr.mxu0 0.0
    %1986 = vmatpush2.msra.mxu0 0.0
    %1987 = vmatprep.subr.mxu0 0.0
    %1988 = vmatpush2.msra.mxu0 0.0
    %1989 = vmatprep.subr.mxu0 0.0
    %1990 = vmatpush2.msra.mxu0 0.0
    %1991 = vmatprep.subr.mxu0 0.0
    %1992 = vmatpush2.msra.mxu0 0.0
    %1993 = vmatprep.subr.mxu0 0.0
    %1994 = vmatpush2.msra.mxu0 0.0
    %1995 = vmatprep.subr.mxu0 0.0
    %1996 = vmatpush2.msra.mxu0 0.0
    %1997 = vmatprep.subr.mxu0 0.0
    %1998 = vmatpush2.msra.mxu0 0.0
    %1999 = vmatprep.subr.mxu0 0.0
    %2000 = vmatpush2.msra.mxu0 0.0
    %2001 = vmatprep.subr.mxu0 0.0
    %2002 = vmatpush2.msra.mxu0 0.0
    %2003 = vmatprep.subr.mxu0 0.0
    %2004 = vmatpush2.msra.mxu0 0.0
    %2005 = vmatprep.subr.mxu0 0.0
    %2006 = vmatpush2.msra.mxu0 0.0
    %2007 = vmatprep.subr.mxu0 0.0
    %2008 = vmatpush2.msra.mxu0 0.0
    %2009 = vmatprep.subr.mxu0 0.0
    %2010 = vmatpush2.msra.mxu0 0.0
    %2011 = vmatprep.mubr.f32.mxu0 0.0
    %2012 = vmatmul.mubr.f32.gmra.mxu0 %v639
    %v2013 = vpop.f32.mrf.mxu0
    %v2014 = vadd.f32 0.0, %v2013
    %v2015 = vpop.f32.mrf.mxu0
    %2016 = vdwg.mxu0
    %2017 = vmatprep.subr.mxu0 0.0
    %2018 = vmatpush1.msra.mxu0 0.0
    %2019 = vmatprep.subr.mxu0 0.0
    %2020 = vmatpush1.msra.mxu0 0.0
    %2021 = vmatprep.subr.mxu0 0.0
    %2022 = vmatpush1.msra.mxu0 0.0
    %2023 = vmatprep.subr.mxu0 0.0
    %2024 = vmatpush1.msra.mxu0 0.0
    %2025 = vmatprep.subr.mxu0 0.0
    %2026 = vmatpush1.msra.mxu0 0.0
    %2027 = vmatprep.subr.mxu0 0.0
    %2028 = vmatpush1.msra.mxu0 0.0
    %2029 = vmatprep.subr.mxu0 0.0
    %2030 = vmatpush1.msra.mxu0 0.0
    %2031 = vmatprep.subr.mxu0 0.0
    %2032 = vmatpush1.msra.mxu0 0.0
    %2033 = vmatprep.subr.mxu0 0.0
    %2034 = vmatpush1.msra.mxu0 0.0
    %2035 = vmatprep.subr.mxu0 0.0
    %2036 = vmatpush1.msra.mxu0 0.0
    %2037 = vmatprep.subr.mxu0 0.0
    %2038 = vmatpush1.msra.mxu0 0.0
    %2039 = vmatprep.subr.mxu0 0.0
    %2040 = vmatpush1.msra.mxu0 0.0
    %2041 = vmatprep.subr.mxu0 0.0
    %2042 = vmatpush1.msra.mxu0 0.0
    %2043 = vmatprep.subr.mxu0 0.0
    %2044 = vmatpush1.msra.mxu0 0.0
    %2045 = vmatprep.subr.mxu0 0.0
    %2046 = vmatpush1.msra.mxu0 %v713
    %2047 = vmatprep.subr.mxu0 0.0
    %2048 = vmatpush1.msra.mxu0 %v712
    %2049 = vmatprep.subr.mxu0 0.0
    %2050 = vmatpush2.msra.mxu0 0.0
    %2051 = vmatprep.subr.mxu0 0.0
    %2052 = vmatpush2.msra.mxu0 0.0
    %2053 = vmatprep.subr.mxu0 0.0
    %2054 = vmatpush2.msra.mxu0 0.0
    %2055 = vmatprep.subr.mxu0 0.0
    %2056 = vmatpush2.msra.mxu0 0.0
    %2057 = vmatprep.subr.mxu0 0.0
    %2058 = vmatpush2.msra.mxu0 0.0
    %2059 = vmatprep.subr.mxu0 0.0
    %2060 = vmatpush2.msra.mxu0 0.0
    %2061 = vmatprep.subr.mxu0 0.0
    %2062 = vmatpush2.msra.mxu0 0.0
    %2063 = vmatprep.subr.mxu0 0.0
    %2064 = vmatpush2.msra.mxu0 0.0
    %2065 = vmatprep.subr.mxu0 0.0
    %2066 = vmatpush2.msra.mxu0 0.0
    %2067 = vmatprep.subr.mxu0 0.0
    %2068 = vmatpush2.msra.mxu0 0.0
    %2069 = vmatprep.subr.mxu0 0.0
    %2070 = vmatpush2.msra.mxu0 0.0
    %2071 = vmatprep.subr.mxu0 0.0
    %2072 = vmatpush2.msra.mxu0 0.0
    %2073 = vmatprep.subr.mxu0 0.0
    %2074 = vmatpush2.msra.mxu0 0.0
    %2075 = vmatprep.subr.mxu0 0.0
    %2076 = vmatpush2.msra.mxu0 0.0
    %2077 = vmatprep.subr.mxu0 0.0
    %2078 = vmatpush2.msra.mxu0 0.0
    %2079 = vmatprep.subr.mxu0 0.0
    %2080 = vmatpush2.msra.mxu0 0.0
    %2081 = vmatprep.mubr.f32.mxu0 0.0
    %2082 = vmatmul.mubr.f32.gmra.mxu0 %v1410
    %v2083 = vpop.f32.mrf.mxu0
    %v2084 = vadd.f32 0.0, %v2083
    %v2085 = vpop.f32.mrf.mxu0
    %2086 = vmatprep.mubr.f32.mxu0 0.0
    %2087 = vmatmul.mubr.f32.gmra.mxu0 %v1413
    %v2088 = vpop.f32.mrf.mxu0
    %v2089 = vadd.f32 0.0, %v2088
    %v2090 = vpop.f32.mrf.mxu0
    %2091 = vdwg.mxu0
    %2092 = vmatprep.subr.mxu0 0.0
    %2093 = vmatpush1.msra.mxu0 0.0
    %2094 = vmatprep.subr.mxu0 0.0
    %2095 = vmatpush1.msra.mxu0 0.0
    %2096 = vmatprep.subr.mxu0 0.0
    %2097 = vmatpush1.msra.mxu0 0.0
    %2098 = vmatprep.subr.mxu0 0.0
    %2099 = vmatpush1.msra.mxu0 0.0
    %2100 = vmatprep.subr.mxu0 0.0
    %2101 = vmatpush1.msra.mxu0 0.0
    %2102 = vmatprep.subr.mxu0 0.0
    %2103 = vmatpush1.msra.mxu0 0.0
    %2104 = vmatprep.subr.mxu0 0.0
    %2105 = vmatpush1.msra.mxu0 0.0
    %2106 = vmatprep.subr.mxu0 0.0
    %2107 = vmatpush1.msra.mxu0 0.0
    %2108 = vmatprep.subr.mxu0 0.0
    %2109 = vmatpush1.msra.mxu0 0.0
    %2110 = vmatprep.subr.mxu0 0.0
    %2111 = vmatpush1.msra.mxu0 0.0
    %2112 = vmatprep.subr.mxu0 0.0
    %2113 = vmatpush1.msra.mxu0 0.0
    %2114 = vmatprep.subr.mxu0 0.0
    %2115 = vmatpush1.msra.mxu0 0.0
    %2116 = vmatprep.subr.mxu0 0.0
    %2117 = vmatpush1.msra.mxu0 0.0
    %2118 = vmatprep.subr.mxu0 0.0
    %2119 = vmatpush1.msra.mxu0 0.0
    %2120 = vmatprep.subr.mxu0 0.0
    %2121 = vmatpush1.msra.mxu0 %v715
    %2122 = vmatprep.subr.mxu0 0.0
    %2123 = vmatpush1.msra.mxu0 %v714
    %2124 = vmatprep.subr.mxu0 0.0
    %2125 = vmatpush2.msra.mxu0 0.0
    %2126 = vmatprep.subr.mxu0 0.0
    %2127 = vmatpush2.msra.mxu0 0.0
    %2128 = vmatprep.subr.mxu0 0.0
    %2129 = vmatpush2.msra.mxu0 0.0
    %2130 = vmatprep.subr.mxu0 0.0
    %2131 = vmatpush2.msra.mxu0 0.0
    %2132 = vmatprep.subr.mxu0 0.0
    %2133 = vmatpush2.msra.mxu0 0.0
    %2134 = vmatprep.subr.mxu0 0.0
    %2135 = vmatpush2.msra.mxu0 0.0
    %2136 = vmatprep.subr.mxu0 0.0
    %2137 = vmatpush2.msra.mxu0 0.0
    %2138 = vmatprep.subr.mxu0 0.0
    %2139 = vmatpush2.msra.mxu0 0.0
    %2140 = vmatprep.subr.mxu0 0.0
    %2141 = vmatpush2.msra.mxu0 0.0
    %2142 = vmatprep.subr.mxu0 0.0
    %2143 = vmatpush2.msra.mxu0 0.0
    %2144 = vmatprep.subr.mxu0 0.0
    %2145 = vmatpush2.msra.mxu0 0.0
    %2146 = vmatprep.subr.mxu0 0.0
    %2147 = vmatpush2.msra.mxu0 0.0
    %2148 = vmatprep.subr.mxu0 0.0
    %2149 = vmatpush2.msra.mxu0 0.0
    %2150 = vmatprep.subr.mxu0 0.0
    %2151 = vmatpush2.msra.mxu0 0.0
    %2152 = vmatprep.subr.mxu0 0.0
    %2153 = vmatpush2.msra.mxu0 0.0
    %2154 = vmatprep.subr.mxu0 0.0
    %2155 = vmatpush2.msra.mxu0 0.0
    %2156 = vmatprep.mubr.f32.mxu0 0.0
    %2157 = vmatmul.mubr.f32.gmra.mxu0 %v1491
    %v2158 = vpop.f32.mrf.mxu0
    %v2159 = vadd.f32 0.0, %v2158
    %v2160 = vpop.f32.mrf.mxu0
    %2161 = vmatprep.mubr.f32.mxu0 0.0
    %2162 = vmatmul.mubr.f32.gmra.mxu0 %v1494
    %v2163 = vpop.f32.mrf.mxu0
    %v2164 = vadd.f32 0.0, %v2163
    %v2165 = vpop.f32.mrf.mxu0
    %2166 = vdwg.mxu0
    %2167 = vmatprep.subr.mxu0 0.0
    %2168 = vmatpush1.msra.mxu0 0.0
    %2169 = vmatprep.subr.mxu0 0.0
    %2170 = vmatpush1.msra.mxu0 0.0
    %2171 = vmatprep.subr.mxu0 0.0
    %2172 = vmatpush1.msra.mxu0 0.0
    %2173 = vmatprep.subr.mxu0 0.0
    %2174 = vmatpush1.msra.mxu0 0.0
    %2175 = vmatprep.subr.mxu0 0.0
    %2176 = vmatpush1.msra.mxu0 0.0
    %2177 = vmatprep.subr.mxu0 0.0
    %2178 = vmatpush1.msra.mxu0 0.0
    %2179 = vmatprep.subr.mxu0 0.0
    %2180 = vmatpush1.msra.mxu0 0.0
    %2181 = vmatprep.subr.mxu0 0.0
    %2182 = vmatpush1.msra.mxu0 0.0
    %2183 = vmatprep.subr.mxu0 0.0
    %2184 = vmatpush1.msra.mxu0 0.0
    %2185 = vmatprep.subr.mxu0 0.0
    %2186 = vmatpush1.msra.mxu0 0.0
    %2187 = vmatprep.subr.mxu0 0.0
    %2188 = vmatpush1.msra.mxu0 0.0
    %2189 = vmatprep.subr.mxu0 0.0
    %2190 = vmatpush1.msra.mxu0 0.0
    %2191 = vmatprep.subr.mxu0 0.0
    %2192 = vmatpush1.msra.mxu0 0.0
    %2193 = vmatprep.subr.mxu0 0.0
    %2194 = vmatpush1.msra.mxu0 0.0
    %2195 = vmatprep.subr.mxu0 0.0
    %2196 = vmatpush1.msra.mxu0 %v717
    %2197 = vmatprep.subr.mxu0 0.0
    %2198 = vmatpush1.msra.mxu0 %v716
    %2199 = vmatprep.subr.mxu0 0.0
    %2200 = vmatpush2.msra.mxu0 0.0
    %2201 = vmatprep.subr.mxu0 0.0
    %2202 = vmatpush2.msra.mxu0 0.0
    %2203 = vmatprep.subr.mxu0 0.0
    %2204 = vmatpush2.msra.mxu0 0.0
    %2205 = vmatprep.subr.mxu0 0.0
    %2206 = vmatpush2.msra.mxu0 0.0
    %2207 = vmatprep.subr.mxu0 0.0
    %2208 = vmatpush2.msra.mxu0 0.0
    %2209 = vmatprep.subr.mxu0 0.0
    %2210 = vmatpush2.msra.mxu0 0.0
    %2211 = vmatprep.subr.mxu0 0.0
    %2212 = vmatpush2.msra.mxu0 0.0
    %2213 = vmatprep.subr.mxu0 0.0
    %2214 = vmatpush2.msra.mxu0 0.0
    %2215 = vmatprep.subr.mxu0 0.0
    %2216 = vmatpush2.msra.mxu0 0.0
    %2217 = vmatprep.subr.mxu0 0.0
    %2218 = vmatpush2.msra.mxu0 0.0
    %2219 = vmatprep.subr.mxu0 0.0
    %2220 = vmatpush2.msra.mxu0 0.0
    %2221 = vmatprep.subr.mxu0 0.0
    %2222 = vmatpush2.msra.mxu0 0.0
    %2223 = vmatprep.subr.mxu0 0.0
    %2224 = vmatpush2.msra.mxu0 0.0
    %2225 = vmatprep.subr.mxu0 0.0
    %2226 = vmatpush2.msra.mxu0 0.0
    %2227 = vmatprep.subr.mxu0 0.0
    %2228 = vmatpush2.msra.mxu0 0.0
    %2229 = vmatprep.subr.mxu0 0.0
    %2230 = vmatpush2.msra.mxu0 0.0
    %2231 = vmatprep.mubr.f32.mxu0 0.0
    %2232 = vmatmul.mubr.f32.gmra.mxu0 %v1572
    %v2233 = vpop.f32.mrf.mxu0
    %v2234 = vadd.f32 0.0, %v2233
    %v2235 = vpop.f32.mrf.mxu0
    %2236 = vmatprep.mubr.f32.mxu0 0.0
    %2237 = vmatmul.mubr.f32.gmra.mxu0 %v1575
    %v2238 = vpop.f32.mrf.mxu0
    %v2239 = vadd.f32 0.0, %v2238
    %v2240 = vpop.f32.mrf.mxu0
    %2241 = vdwg.mxu0
    %2242 = vmatprep.subr.mxu0 0.0
    %2243 = vmatpush1.msra.mxu0 0.0
    %2244 = vmatprep.subr.mxu0 0.0
    %2245 = vmatpush1.msra.mxu0 0.0
    %2246 = vmatprep.subr.mxu0 0.0
    %2247 = vmatpush1.msra.mxu0 0.0
    %2248 = vmatprep.subr.mxu0 0.0
    %2249 = vmatpush1.msra.mxu0 0.0
    %2250 = vmatprep.subr.mxu0 0.0
    %2251 = vmatpush1.msra.mxu0 0.0
    %2252 = vmatprep.subr.mxu0 0.0
    %2253 = vmatpush1.msra.mxu0 0.0
    %2254 = vmatprep.subr.mxu0 0.0
    %2255 = vmatpush1.msra.mxu0 0.0
    %2256 = vmatprep.subr.mxu0 0.0
    %2257 = vmatpush1.msra.mxu0 0.0
    %2258 = vmatprep.subr.mxu0 0.0
    %2259 = vmatpush1.msra.mxu0 0.0
    %2260 = vmatprep.subr.mxu0 0.0
    %2261 = vmatpush1.msra.mxu0 0.0
    %2262 = vmatprep.subr.mxu0 0.0
    %2263 = vmatpush1.msra.mxu0 %v2239
    %2264 = vmatprep.subr.mxu0 0.0
    %2265 = vmatpush1.msra.mxu0 %v2234
    %2266 = vmatprep.subr.mxu0 0.0
    %2267 = vmatpush1.msra.mxu0 %v2164
    %2268 = vmatprep.subr.mxu0 0.0
    %2269 = vmatpush1.msra.mxu0 %v2159
    %2270 = vmatprep.subr.mxu0 0.0
    %2271 = vmatpush1.msra.mxu0 %v2089
    %2272 = vmatprep.subr.mxu0 0.0
    %2273 = vmatpush1.msra.mxu0 %v2084
    %2274 = vmatprep.subr.mxu0 0.0
    %2275 = vmatpush2.msra.mxu0 0.0
    %2276 = vmatprep.subr.mxu0 0.0
    %2277 = vmatpush2.msra.mxu0 0.0
    %2278 = vmatprep.subr.mxu0 0.0
    %2279 = vmatpush2.msra.mxu0 0.0
    %2280 = vmatprep.subr.mxu0 0.0
    %2281 = vmatpush2.msra.mxu0 0.0
    %2282 = vmatprep.subr.mxu0 0.0
    %2283 = vmatpush2.msra.mxu0 0.0
    %2284 = vmatprep.subr.mxu0 0.0
    %2285 = vmatpush2.msra.mxu0 0.0
    %2286 = vmatprep.subr.mxu0 0.0
    %2287 = vmatpush2.msra.mxu0 0.0
    %2288 = vmatprep.subr.mxu0 0.0
    %2289 = vmatpush2.msra.mxu0 0.0
    %2290 = vmatprep.subr.mxu0 0.0
    %2291 = vmatpush2.msra.mxu0 0.0
    %2292 = vmatprep.subr.mxu0 0.0
    %2293 = vmatpush2.msra.mxu0 0.0
    %2294 = vmatprep.subr.mxu0 0.0
    %2295 = vmatpush2.msra.mxu0 0.0
    %2296 = vmatprep.subr.mxu0 0.0
    %2297 = vmatpush2.msra.mxu0 0.0
    %2298 = vmatprep.subr.mxu0 0.0
    %2299 = vmatpush2.msra.mxu0 0.0
    %2300 = vmatprep.subr.mxu0 0.0
    %2301 = vmatpush2.msra.mxu0 0.0
    %2302 = vmatprep.subr.mxu0 0.0
    %2303 = vmatpush2.msra.mxu0 0.0
    %2304 = vmatprep.subr.mxu0 0.0
    %2305 = vmatpush2.msra.mxu0 0.0
    %2306 = vmatprep.mubr.f32.mxu0 0.0
    %2307 = vmatmul.mubr.f32.gmra.mxu0 %v976
    %v2308 = vpop.f32.mrf.mxu0
    %v2309 = vadd.f32 0.0, %v2308
    %v2310 = vpop.f32.mrf.mxu0
    %2311 = vdwg.mxu0
    %2312 = vmatprep.subr.mxu0 0.0
    %2313 = vmatpush1.msra.mxu0 0.0
    %2314 = vmatprep.subr.mxu0 0.0
    %2315 = vmatpush1.msra.mxu0 0.0
    %2316 = vmatprep.subr.mxu0 0.0
    %2317 = vmatpush1.msra.mxu0 0.0
    %2318 = vmatprep.subr.mxu0 0.0
    %2319 = vmatpush1.msra.mxu0 0.0
    %2320 = vmatprep.subr.mxu0 0.0
    %2321 = vmatpush1.msra.mxu0 0.0
    %2322 = vmatprep.subr.mxu0 0.0
    %2323 = vmatpush1.msra.mxu0 0.0
    %2324 = vmatprep.subr.mxu0 0.0
    %2325 = vmatpush1.msra.mxu0 0.0
    %2326 = vmatprep.subr.mxu0 0.0
    %2327 = vmatpush1.msra.mxu0 0.0
    %2328 = vmatprep.subr.mxu0 0.0
    %2329 = vmatpush1.msra.mxu0 0.0
    %2330 = vmatprep.subr.mxu0 0.0
    %2331 = vmatpush1.msra.mxu0 0.0
    %2332 = vmatprep.subr.mxu0 0.0
    %2333 = vmatpush1.msra.mxu0 0.0
    %2334 = vmatprep.subr.mxu0 0.0
    %2335 = vmatpush1.msra.mxu0 0.0
    %2336 = vmatprep.subr.mxu0 0.0
    %2337 = vmatpush1.msra.mxu0 0.0
    %2338 = vmatprep.subr.mxu0 0.0
    %2339 = vmatpush1.msra.mxu0 0.0
    %2340 = vmatprep.subr.mxu0 0.0
    %2341 = vmatpush1.msra.mxu0 %v1050
    %2342 = vmatprep.subr.mxu0 0.0
    %2343 = vmatpush1.msra.mxu0 %v1049
    %2344 = vmatprep.subr.mxu0 0.0
    %2345 = vmatpush2.msra.mxu0 0.0
    %2346 = vmatprep.subr.mxu0 0.0
    %2347 = vmatpush2.msra.mxu0 0.0
    %2348 = vmatprep.subr.mxu0 0.0
    %2349 = vmatpush2.msra.mxu0 0.0
    %2350 = vmatprep.subr.mxu0 0.0
    %2351 = vmatpush2.msra.mxu0 0.0
    %2352 = vmatprep.subr.mxu0 0.0
    %2353 = vmatpush2.msra.mxu0 0.0
    %2354 = vmatprep.subr.mxu0 0.0
    %2355 = vmatpush2.msra.mxu0 0.0
    %2356 = vmatprep.subr.mxu0 0.0
    %2357 = vmatpush2.msra.mxu0 0.0
    %2358 = vmatprep.subr.mxu0 0.0
    %2359 = vmatpush2.msra.mxu0 0.0
    %2360 = vmatprep.subr.mxu0 0.0
    %2361 = vmatpush2.msra.mxu0 0.0
    %2362 = vmatprep.subr.mxu0 0.0
    %2363 = vmatpush2.msra.mxu0 0.0
    %2364 = vmatprep.subr.mxu0 0.0
    %2365 = vmatpush2.msra.mxu0 0.0
    %2366 = vmatprep.subr.mxu0 0.0
    %2367 = vmatpush2.msra.mxu0 0.0
    %2368 = vmatprep.subr.mxu0 0.0
    %2369 = vmatpush2.msra.mxu0 0.0
    %2370 = vmatprep.subr.mxu0 0.0
    %2371 = vmatpush2.msra.mxu0 0.0
    %2372 = vmatprep.subr.mxu0 0.0
    %2373 = vmatpush2.msra.mxu0 0.0
    %2374 = vmatprep.subr.mxu0 0.0
    %2375 = vmatpush2.msra.mxu0 0.0
    %2376 = vmatprep.mubr.f32.mxu0 0.0
    %2377 = vmatmul.mubr.f32.gmra.mxu0 %v1410
    %v2378 = vpop.f32.mrf.mxu0
    %v2379 = vadd.f32 0.0, %v2378
    %v2380 = vpop.f32.mrf.mxu0
    %2381 = vmatprep.mubr.f32.mxu0 0.0
    %2382 = vmatmul.mubr.f32.gmra.mxu0 %v1413
    %v2383 = vpop.f32.mrf.mxu0
    %v2384 = vadd.f32 0.0, %v2383
    %v2385 = vpop.f32.mrf.mxu0
    %2386 = vdwg.mxu0
    %2387 = vmatprep.subr.mxu0 0.0
    %2388 = vmatpush1.msra.mxu0 0.0
    %2389 = vmatprep.subr.mxu0 0.0
    %2390 = vmatpush1.msra.mxu0 0.0
    %2391 = vmatprep.subr.mxu0 0.0
    %2392 = vmatpush1.msra.mxu0 0.0
    %2393 = vmatprep.subr.mxu0 0.0
    %2394 = vmatpush1.msra.mxu0 0.0
    %2395 = vmatprep.subr.mxu0 0.0
    %2396 = vmatpush1.msra.mxu0 0.0
    %2397 = vmatprep.subr.mxu0 0.0
    %2398 = vmatpush1.msra.mxu0 0.0
    %2399 = vmatprep.subr.mxu0 0.0
    %2400 = vmatpush1.msra.mxu0 0.0
    %2401 = vmatprep.subr.mxu0 0.0
    %2402 = vmatpush1.msra.mxu0 0.0
    %2403 = vmatprep.subr.mxu0 0.0
    %2404 = vmatpush1.msra.mxu0 0.0
    %2405 = vmatprep.subr.mxu0 0.0
    %2406 = vmatpush1.msra.mxu0 0.0
    %2407 = vmatprep.subr.mxu0 0.0
    %2408 = vmatpush1.msra.mxu0 0.0
    %2409 = vmatprep.subr.mxu0 0.0
    %2410 = vmatpush1.msra.mxu0 0.0
    %2411 = vmatprep.subr.mxu0 0.0
    %2412 = vmatpush1.msra.mxu0 0.0
    %2413 = vmatprep.subr.mxu0 0.0
    %2414 = vmatpush1.msra.mxu0 0.0
    %2415 = vmatprep.subr.mxu0 0.0
    %2416 = vmatpush1.msra.mxu0 %v1052
    %2417 = vmatprep.subr.mxu0 0.0
    %2418 = vmatpush1.msra.mxu0 %v1051
    %2419 = vmatprep.subr.mxu0 0.0
    %2420 = vmatpush2.msra.mxu0 0.0
    %2421 = vmatprep.subr.mxu0 0.0
    %2422 = vmatpush2.msra.mxu0 0.0
    %2423 = vmatprep.subr.mxu0 0.0
    %2424 = vmatpush2.msra.mxu0 0.0
    %2425 = vmatprep.subr.mxu0 0.0
    %2426 = vmatpush2.msra.mxu0 0.0
    %2427 = vmatprep.subr.mxu0 0.0
    %2428 = vmatpush2.msra.mxu0 0.0
    %2429 = vmatprep.subr.mxu0 0.0
    %2430 = vmatpush2.msra.mxu0 0.0
    %2431 = vmatprep.subr.mxu0 0.0
    %2432 = vmatpush2.msra.mxu0 0.0
    %2433 = vmatprep.subr.mxu0 0.0
    %2434 = vmatpush2.msra.mxu0 0.0
    %2435 = vmatprep.subr.mxu0 0.0
    %2436 = vmatpush2.msra.mxu0 0.0
    %2437 = vmatprep.subr.mxu0 0.0
    %2438 = vmatpush2.msra.mxu0 0.0
    %2439 = vmatprep.subr.mxu0 0.0
    %2440 = vmatpush2.msra.mxu0 0.0
    %2441 = vmatprep.subr.mxu0 0.0
    %2442 = vmatpush2.msra.mxu0 0.0
    %2443 = vmatprep.subr.mxu0 0.0
    %2444 = vmatpush2.msra.mxu0 0.0
    %2445 = vmatprep.subr.mxu0 0.0
    %2446 = vmatpush2.msra.mxu0 0.0
    %2447 = vmatprep.subr.mxu0 0.0
    %2448 = vmatpush2.msra.mxu0 0.0
    %2449 = vmatprep.subr.mxu0 0.0
    %2450 = vmatpush2.msra.mxu0 0.0
    %2451 = vmatprep.mubr.f32.mxu0 0.0
    %2452 = vmatmul.mubr.f32.gmra.mxu0 %v1491
    %v2453 = vpop.f32.mrf.mxu0
    %v2454 = vadd.f32 0.0, %v2453
    %v2455 = vpop.f32.mrf.mxu0
    %2456 = vmatprep.mubr.f32.mxu0 0.0
    %2457 = vmatmul.mubr.f32.gmra.mxu0 %v1494
    %v2458 = vpop.f32.mrf.mxu0
    %v2459 = vadd.f32 0.0, %v2458
    %v2460 = vpop.f32.mrf.mxu0
    %2461 = vdwg.mxu0
    %2462 = vmatprep.subr.mxu0 0.0
    %2463 = vmatpush1.msra.mxu0 0.0
    %2464 = vmatprep.subr.mxu0 0.0
    %2465 = vmatpush1.msra.mxu0 0.0
    %2466 = vmatprep.subr.mxu0 0.0
    %2467 = vmatpush1.msra.mxu0 0.0
    %2468 = vmatprep.subr.mxu0 0.0
    %2469 = vmatpush1.msra.mxu0 0.0
    %2470 = vmatprep.subr.mxu0 0.0
    %2471 = vmatpush1.msra.mxu0 0.0
    %2472 = vmatprep.subr.mxu0 0.0
    %2473 = vmatpush1.msra.mxu0 0.0
    %2474 = vmatprep.subr.mxu0 0.0
    %2475 = vmatpush1.msra.mxu0 0.0
    %2476 = vmatprep.subr.mxu0 0.0
    %2477 = vmatpush1.msra.mxu0 0.0
    %2478 = vmatprep.subr.mxu0 0.0
    %2479 = vmatpush1.msra.mxu0 0.0
    %2480 = vmatprep.subr.mxu0 0.0
    %2481 = vmatpush1.msra.mxu0 0.0
    %2482 = vmatprep.subr.mxu0 0.0
    %2483 = vmatpush1.msra.mxu0 0.0
    %2484 = vmatprep.subr.mxu0 0.0
    %2485 = vmatpush1.msra.mxu0 0.0
    %2486 = vmatprep.subr.mxu0 0.0
    %2487 = vmatpush1.msra.mxu0 0.0
    %2488 = vmatprep.subr.mxu0 0.0
    %2489 = vmatpush1.msra.mxu0 0.0
    %2490 = vmatprep.subr.mxu0 0.0
    %2491 = vmatpush1.msra.mxu0 %v1054
    %2492 = vmatprep.subr.mxu0 0.0
    %2493 = vmatpush1.msra.mxu0 %v1053
    %2494 = vmatprep.subr.mxu0 0.0
    %2495 = vmatpush2.msra.mxu0 0.0
    %2496 = vmatprep.subr.mxu0 0.0
    %2497 = vmatpush2.msra.mxu0 0.0
    %2498 = vmatprep.subr.mxu0 0.0
    %2499 = vmatpush2.msra.mxu0 0.0
    %2500 = vmatprep.subr.mxu0 0.0
    %2501 = vmatpush2.msra.mxu0 0.0
    %2502 = vmatprep.subr.mxu0 0.0
    %2503 = vmatpush2.msra.mxu0 0.0
    %2504 = vmatprep.subr.mxu0 0.0
    %2505 = vmatpush2.msra.mxu0 0.0
    %2506 = vmatprep.subr.mxu0 0.0
    %2507 = vmatpush2.msra.mxu0 0.0
    %2508 = vmatprep.subr.mxu0 0.0
    %2509 = vmatpush2.msra.mxu0 0.0
    %2510 = vmatprep.subr.mxu0 0.0
    %2511 = vmatpush2.msra.mxu0 0.0
    %2512 = vmatprep.subr.mxu0 0.0
    %2513 = vmatpush2.msra.mxu0 0.0
    %2514 = vmatprep.subr.mxu0 0.0
    %2515 = vmatpush2.msra.mxu0 0.0
    %2516 = vmatprep.subr.mxu0 0.0
    %2517 = vmatpush2.msra.mxu0 0.0
    %2518 = vmatprep.subr.mxu0 0.0
    %2519 = vmatpush2.msra.mxu0 0.0
    %2520 = vmatprep.subr.mxu0 0.0
    %2521 = vmatpush2.msra.mxu0 0.0
    %2522 = vmatprep.subr.mxu0 0.0
    %2523 = vmatpush2.msra.mxu0 0.0
    %2524 = vmatprep.subr.mxu0 0.0
    %2525 = vmatpush2.msra.mxu0 0.0
    %2526 = vmatprep.mubr.f32.mxu0 0.0
    %2527 = vmatmul.mubr.f32.gmra.mxu0 %v1572
    %v2528 = vpop.f32.mrf.mxu0
    %v2529 = vadd.f32 0.0, %v2528
    %v2530 = vpop.f32.mrf.mxu0
    %2531 = vmatprep.mubr.f32.mxu0 0.0
    %2532 = vmatmul.mubr.f32.gmra.mxu0 %v1575
    %v2533 = vpop.f32.mrf.mxu0
    %v2534 = vadd.f32 0.0, %v2533
    %v2535 = vpop.f32.mrf.mxu0
    %2536 = vdwg.mxu0
    %2537 = vmatprep.subr.mxu0 0.0
    %2538 = vmatpush1.msra.mxu0 0.0
    %2539 = vmatprep.subr.mxu0 0.0
    %2540 = vmatpush1.msra.mxu0 0.0
    %2541 = vmatprep.subr.mxu0 0.0
    %2542 = vmatpush1.msra.mxu0 0.0
    %2543 = vmatprep.subr.mxu0 0.0
    %2544 = vmatpush1.msra.mxu0 0.0
    %2545 = vmatprep.subr.mxu0 0.0
    %2546 = vmatpush1.msra.mxu0 0.0
    %2547 = vmatprep.subr.mxu0 0.0
    %2548 = vmatpush1.msra.mxu0 0.0
    %2549 = vmatprep.subr.mxu0 0.0
    %2550 = vmatpush1.msra.mxu0 0.0
    %2551 = vmatprep.subr.mxu0 0.0
    %2552 = vmatpush1.msra.mxu0 0.0
    %2553 = vmatprep.subr.mxu0 0.0
    %2554 = vmatpush1.msra.mxu0 0.0
    %2555 = vmatprep.subr.mxu0 0.0
    %2556 = vmatpush1.msra.mxu0 0.0
    %2557 = vmatprep.subr.mxu0 0.0
    %2558 = vmatpush1.msra.mxu0 %v2534
    %2559 = vmatprep.subr.mxu0 0.0
    %2560 = vmatpush1.msra.mxu0 %v2529
    %2561 = vmatprep.subr.mxu0 0.0
    %2562 = vmatpush1.msra.mxu0 %v2459
    %2563 = vmatprep.subr.mxu0 0.0
    %2564 = vmatpush1.msra.mxu0 %v2454
    %2565 = vmatprep.subr.mxu0 0.0
    %2566 = vmatpush1.msra.mxu0 %v2384
    %2567 = vmatprep.subr.mxu0 0.0
    %2568 = vmatpush1.msra.mxu0 %v2379
    %2569 = vmatprep.subr.mxu0 0.0
    %2570 = vmatpush2.msra.mxu0 0.0
    %2571 = vmatprep.subr.mxu0 0.0
    %2572 = vmatpush2.msra.mxu0 0.0
    %2573 = vmatprep.subr.mxu0 0.0
    %2574 = vmatpush2.msra.mxu0 0.0
    %2575 = vmatprep.subr.mxu0 0.0
    %2576 = vmatpush2.msra.mxu0 0.0
    %2577 = vmatprep.subr.mxu0 0.0
    %2578 = vmatpush2.msra.mxu0 0.0
    %2579 = vmatprep.subr.mxu0 0.0
    %2580 = vmatpush2.msra.mxu0 0.0
    %2581 = vmatprep.subr.mxu0 0.0
    %2582 = vmatpush2.msra.mxu0 0.0
    %2583 = vmatprep.subr.mxu0 0.0
    %2584 = vmatpush2.msra.mxu0 0.0
    %2585 = vmatprep.subr.mxu0 0.0
    %2586 = vmatpush2.msra.mxu0 0.0
    %2587 = vmatprep.subr.mxu0 0.0
    %2588 = vmatpush2.msra.mxu0 0.0
    %2589 = vmatprep.subr.mxu0 0.0
    %2590 = vmatpush2.msra.mxu0 0.0
    %2591 = vmatprep.subr.mxu0 0.0
    %2592 = vmatpush2.msra.mxu0 0.0
    %2593 = vmatprep.subr.mxu0 0.0
    %2594 = vmatpush2.msra.mxu0 0.0
    %2595 = vmatprep.subr.mxu0 0.0
    %2596 = vmatpush2.msra.mxu0 0.0
    %2597 = vmatprep.subr.mxu0 0.0
    %2598 = vmatpush2.msra.mxu0 0.0
    %2599 = vmatprep.subr.mxu0 0.0
    %2600 = vmatpush2.msra.mxu0 0.0
    %2601 = vmatprep.mubr.f32.mxu0 0.0
    %2602 = vmatmul.mubr.f32.gmra.mxu0 %v1313
    %v2603 = vpop.f32.mrf.mxu0
    %v2604 = vadd.f32 0.0, %v2603
    %v2605 = vpop.f32.mrf.mxu0
    %2606 = vdwg.mxu0
    %2608 = vrot.lane.b32.xlu0 %v2014, 8
    %v2609 = vpop.permute.xlu0 %2608
    %2612 = vrot.lane.b32.xlu0 %v2309, 16
    %v2613 = vpop.permute.xlu0 %2612
    %2616 = vrot.lane.b32.xlu0 %v2604, 24
    %v2617 = vpop.permute.xlu0 %2616
    %v2619 = vsel %vm1397, %v1719, %v2609
    %v2620 = vsel %vm24, %v2619, %v2613
    %v2621 = vsel %vm1400, %v2620, %v2617
    %vm2622 = vcmask 261120
    %2623 = vst.msk [vmem:[#allocation2] sm:$0xff] %vm2622, %v1401
    %2624 = vst.msk [vmem:[#allocation2 + $0x8] sm:$0xff] %vm2622, %v2621
    // Predicated region
    $region10: #{tpu_custom_call.1} parent=1 // pred_check
      _
    $region11: #{tpu_custom_call.1} parent=1 // pred_check_branch
      %2626 = sbr.rel (0) target = $region13
    $region12: #{tpu_custom_call.1} parent=1 // pred_region
      %s2628 = ssub.s32 256, 256
      %2629 = vsyncadd [#allocation3], %s2628
      %s2630 = sshll.u32 [#allocation2], 4
      %s2631 = int_to_ptr.vmem [resolvable:$true] %s2630
      %2636 = dma.vmem_to_hbm [thread:$0]  %s2631, 256, %s2, [#allocation3], 128, 128, 8
    $region13: #{tpu_custom_call.1} parent=1 // pred_fallthru
      _
    // Predicated region
    $region14: #{tpu_custom_call.1} parent=1 // pred_check
      _
    $region15: #{tpu_custom_call.1} parent=1 // pred_check_branch
      %2638 = sbr.rel (0) target = $region17
    $region16: #{tpu_custom_call.1} parent=1 // pred_region
      %2639 = dma.done [#allocation3], 256
    $region17: #{tpu_custom_call.1} parent=1 // pred_fallthru
      _
    %2640 = vsyncpa [#allocation3], 1

</llo_original>
